<compile_context>
chip_gen: v6e
topology: v6e:2x2x1
jax: 0.10.0
libtpu: 0.0.40
codegen_flags: <defaults>
</compile_context>

<pallas_src>
import numpy as np
import jax
import jax.numpy as jnp
from jax import lax
from jax.experimental import pallas as pl
from jax.experimental.pallas import tpu as pltpu


_LANES = 128          # vreg lane width: each fused gate slab is lane-aligned
_SUBLANES = 8         # sublane granularity for the recurrent contraction dim
_UNROLL_T_MAX = 128   # fully unroll the time loop up to this sequence length


def _round_up(n, m):
    return ((n + m - 1) // m) * m


def gru_classifier_kernel(x_ref, wih_ref, bi_ref, whh_ref, bhn_ref,
                          wcls_ref, bcls_ref, out_ref, gi_ref):
    """Single invocation; whole sequence resident in VMEM.

    Fused layout: gates [r, z, n] each occupy their own Hp-wide (128-lane
    aligned) slab of the last axis of the projections.
      x_ref    : (T, C)
      wih_ref  : (C, 3*Hp)    bi_ref  : (1, 3*Hp)  (r,z: b_ih+b_hh folded)
      whh_ref  : (Hs, 3*Hp)   bhn_ref : (1, Hp)    (n-gate b_hh only)
      wcls_ref : (Hs, Op)     bcls_ref: (1, Op)    out_ref : (1, Op)
      gi_ref   : (T, 3*Hp) VMEM scratch (used only on the long-T path)
    """
    T = x_ref.shape[0]
    Hs = whh_ref.shape[0]          # recurrent contraction dim (8-multiple)
    Hp = whh_ref.shape[1] // 3     # lane-aligned gate slab width (128-multiple)

    # Hoisted input projection: one matmul covers every timestep & gate.
    gi_all = jnp.dot(x_ref[...], wih_ref[...],
                     preferred_element_type=jnp.float32) + bi_ref[...]   # (T, 3Hp)

    w_hh = whh_ref[...]            # (Hs, 3Hp)
    b_hn = bhn_ref[...]            # (1, Hp)

    def step(gi, h):
        # Serial critical path: one small-K MXU issue + EUP nonlinearities;
        # every gate slice is lane-aligned (offsets 0, Hp, 2*Hp).
        gh = jnp.dot(h[:, :Hs], w_hh, preferred_element_type=jnp.float32)  # (1,3Hp)
        r = jax.nn.sigmoid(gi[:, 0 * Hp:1 * Hp] + gh[:, 0 * Hp:1 * Hp])
        z = jax.nn.sigmoid(gi[:, 1 * Hp:2 * Hp] + gh[:, 1 * Hp:2 * Hp])
        n = jnp.tanh(gi[:, 2 * Hp:3 * Hp] + r * (gh[:, 2 * Hp:3 * Hp] + b_hn))
        return n + z * (h - n)     # == (1 - z) * n + z * h

    # h0 = zeros (self.reset()); padded lanes stay exactly 0 through the loop.
    h = jnp.zeros((1, Hp), jnp.float32)

    if T <= _UNROLL_T_MAX:
        # Small static T: fully unrolled for maximum LLO scheduling visibility.
        for t in range(T):
            h = step(gi_all[t:t + 1, :], h)
    else:
        # Long T: bounded code size / register pressure; gi_all lives in a
        # VMEM scratch and is read back one (1, 3Hp) row per step.
        gi_ref[...] = gi_all
        h = lax.fori_loop(
            0, T, lambda t, hh: step(gi_ref[pl.ds(t, 1), :], hh), h, unroll=8)

    # Classifier head: exactly once, after the recurrence; lane-dense store.
    logits = jnp.dot(h[:, :Hs], wcls_ref[...],
                     preferred_element_type=jnp.float32) + bcls_ref[...]
    out_ref[...] = jax.nn.sigmoid(logits)


def prepare_fused_params(params, *, channels, hidden, outputs):
    """Host-side fusion + padding of the (pre-transposed) GRU/Linear params."""
    Hp = _round_up(hidden, _LANES)       # lane-aligned gate slab width
    Hs = _round_up(hidden, _SUBLANES)    # recurrent contraction dim
    Op = _round_up(outputs, _LANES)      # lane-dense classifier output width

    wih = np.asarray(params["w_ih"], np.float32)    # (3, C, H)
    whh = np.asarray(params["w_hh"], np.float32)    # (3, H, H)
    bih = np.asarray(params["b_ih"], np.float32)    # (3, 1, H)
    bhh = np.asarray(params["b_hh"], np.float32)    # (3, 1, H)
    wcls = np.asarray(params["w_cls"], np.float32)  # (H, O)
    bcls = np.asarray(params["b_cls"], np.float32)  # (1, O)

    w_ih_f = np.zeros((channels, 3 * Hp), np.float32)
    w_hh_f = np.zeros((Hs, 3 * Hp), np.float32)
    b_i_f = np.zeros((1, 3 * Hp), np.float32)
    b_hn_f = np.zeros((1, Hp), np.float32)
    for g in range(3):                               # gate order [r, z, n]
        sl = slice(g * Hp, g * Hp + hidden)
        w_ih_f[:, sl] = wih[g]
        w_hh_f[:hidden, sl] = whh[g]
        if g < 2:
            b_i_f[:, sl] = bih[g] + bhh[g]           # fold b_ih + b_hh (r, z)
        else:
            b_i_f[:, sl] = bih[g]                    # n: b_ih rides the input proj
    b_hn_f[:, :hidden] = bhh[2]                      # n: b_hh stays in the loop

    w_cls_p = np.zeros((Hs, Op), np.float32)
    w_cls_p[:hidden, :outputs] = wcls
    b_cls_p = np.zeros((1, Op), np.float32)
    b_cls_p[:, :outputs] = bcls

    return {
        "w_ih_f": jnp.asarray(w_ih_f), "b_i_f": jnp.asarray(b_i_f),
        "w_hh_f": jnp.asarray(w_hh_f), "b_hn_f": jnp.asarray(b_hn_f),
        "w_cls_p": jnp.asarray(w_cls_p), "b_cls_p": jnp.asarray(b_cls_p),
    }


def rnn_classifier_forward(x, fused, *, channels, outputs):
    """x: any shape whose numel is a multiple of `channels` (like torch .view)."""
    x = jnp.asarray(x, jnp.float32).reshape(-1, channels)   # (T, C), batch=1
    T = x.shape[0]
    Hs, G = fused["w_hh_f"].shape
    Hp = G // 3
    Op = fused["b_cls_p"].shape[1]

    # Advisory cost so XLA can overlap the weight HBM->VMEM DMA with neighbors.
    flops = (2 * T * channels * G          # input projection
             + T * 2 * Hs * G              # per-step recurrent matmul
             + T * 12 * Hp                 # gate elementwise work
             + 2 * Hs * Op)                # classifier head
    transcendentals = T * 3 * Hp + Op      # 2 sigmoids + 1 tanh per step + head
    bytes_accessed = int(sum(int(np.prod(a.shape)) * 4 for a in
                             (x, fused["w_ih_f"], fused["b_i_f"],
                              fused["w_hh_f"], fused["b_hn_f"],
                              fused["w_cls_p"], fused["b_cls_p"])) + Op * 4)

    vmem = pl.BlockSpec(memory_space=pltpu.MemorySpace.VMEM)
    out = pl.pallas_call(
        gru_classifier_kernel,
        out_shape=jax.ShapeDtypeStruct((1, Op), jnp.float32),
        in_specs=[vmem] * 7,       # whole (tiny) operands resident in VMEM
        out_specs=vmem,
        scratch_shapes=[pltpu.VMEM((T, G), jnp.float32)],   # long-T gi buffer
        cost_estimate=pl.CostEstimate(flops=flops,
                                      transcendentals=transcendentals,
                                      bytes_accessed=bytes_accessed),
    )(x, fused["w_ih_f"], fused["b_i_f"], fused["w_hh_f"], fused["b_hn_f"],
      fused["w_cls_p"], fused["b_cls_p"])
    return out[0, :outputs]        # (outputs,), matches PyTorch's 1-D return


def init_params(key, *, channels, hidden, outputs):
    """Deterministic synthetic init (uniform +-1/sqrt(hidden), like PyTorch GRU)."""
    k = 1.0 / float(np.sqrt(hidden))
    ks = jax.random.split(key, 6)
    return {
        "w_ih": jax.random.uniform(ks[0], (3, channels, hidden), jnp.float32, -k, k),
        "w_hh": jax.random.uniform(ks[1], (3, hidden, hidden), jnp.float32, -k, k),
        "b_ih": jax.random.uniform(ks[2], (3, 1, hidden), jnp.float32, -k, k),
        "b_hh": jax.random.uniform(ks[3], (3, 1, hidden), jnp.float32, -k, k),
        "w_cls": jax.random.uniform(ks[4], (hidden, outputs), jnp.float32, -k, k),
        "b_cls": jax.random.uniform(ks[5], (1, outputs), jnp.float32, -k, k),
    }


def reference_forward(x, params, *, channels):
    """Pure NumPy reference of the PyTorch forward (GRU + Linear + sigmoid)."""
    def sig(v):
        return 1.0 / (1.0 + np.exp(-v))

    xs = np.asarray(x, np.float32).reshape(-1, channels)
    wih = np.asarray(params["w_ih"]); whh = np.asarray(params["w_hh"])
    bih = np.asarray(params["b_ih"]); bhh = np.asarray(params["b_hh"])
    wcls = np.asarray(params["w_cls"]); bcls = np.asarray(params["b_cls"])
    h = np.zeros((1, whh.shape[1]), np.float32)
    for t in range(xs.shape[0]):
        xt = xs[t:t + 1]
        r = sig(xt @ wih[0] + bih[0] + h @ whh[0] + bhh[0])
        z = sig(xt @ wih[1] + bih[1] + h @ whh[1] + bhh[1])
        n = np.tanh(xt @ wih[2] + bih[2] + r * (h @ whh[2] + bhh[2]))
        h = (1.0 - z) * n + z * h
    return sig(h @ wcls + bcls).reshape(-1)


if __name__ == "__main__":
    channels, hidden, outputs, seq = 4, 32, 8, 8

    key = jax.random.PRNGKey(0)
    k_x, k_p = jax.random.split(key)
    x = jax.random.normal(k_x, (seq, channels), jnp.float32)  # viewed to (T,1,C)
    params = init_params(k_p, channels=channels, hidden=hidden, outputs=outputs)
    fused = prepare_fused_params(params, channels=channels, hidden=hidden,
                                 outputs=outputs)

    out = rnn_classifier_forward(x, fused, channels=channels, outputs=outputs)
    out = jax.block_until_ready(out)

    ref = reference_forward(x, params, channels=channels)
    assert out.shape == (outputs,)
    np.testing.assert_allclose(np.asarray(out), ref, rtol=1e-4, atol=1e-5)

    print("KERNEL_OK")
</pallas_src>

<mosaic_0001>
module attributes {stable_mosaic.version = 11 : i64} {
  func.func @gru_classifier_kernel(%arg0: memref<8x4xf32, #tpu.memory_space<vmem>>, %arg1: memref<4x384xf32, #tpu.memory_space<vmem>>, %arg2: memref<1x384xf32, #tpu.memory_space<vmem>>, %arg3: memref<32x384xf32, #tpu.memory_space<vmem>>, %arg4: memref<1x128xf32, #tpu.memory_space<vmem>>, %arg5: memref<32x128xf32, #tpu.memory_space<vmem>>, %arg6: memref<1x128xf32, #tpu.memory_space<vmem>>, %arg7: memref<1x128xf32, #tpu.memory_space<vmem>>, %arg8: memref<8x384xf32, #tpu.memory_space<vmem>>) attributes {dimension_semantics = [], scalar_prefetch = 0 : i64, scratch_operands = 1 : i64, tpu.core_type = #tpu.core_type<tc>} {
    %c0 = arith.constant 0 : index
    %c0_0 = arith.constant 0 : index
    %0 = vector.load %arg0[%c0, %c0_0] : memref<8x4xf32, #tpu.memory_space<vmem>>, vector<8x4xf32>
    %c0_1 = arith.constant 0 : index
    %c0_2 = arith.constant 0 : index
    %1 = vector.load %arg1[%c0_1, %c0_2] : memref<4x384xf32, #tpu.memory_space<vmem>>, vector<4x384xf32>
    %cst = arith.constant dense<0.000000e+00> : vector<8x384xf32>
    %2 = tpu.matmul %0, %1, %cst {dimension_numbers = #tpu.dot_dimension_numbers<[1], [0], [0], [1], [0, 0, 1, 1], [], []>} : vector<8x4xf32>, vector<4x384xf32>, vector<8x384xf32> -> vector<8x384xf32>
    %c0_3 = arith.constant 0 : index
    %c0_4 = arith.constant 0 : index
    %3 = vector.load %arg2[%c0_3, %c0_4] : memref<1x384xf32, #tpu.memory_space<vmem>>, vector<1x384xf32>
    %4 = vector.broadcast %3 : vector<1x384xf32> to vector<8x384xf32>
    %5 = arith.addf %2, %4 : vector<8x384xf32>
    %c0_5 = arith.constant 0 : index
    %c0_6 = arith.constant 0 : index
    %6 = vector.load %arg3[%c0_5, %c0_6] : memref<32x384xf32, #tpu.memory_space<vmem>>, vector<32x384xf32>
    %c0_7 = arith.constant 0 : index
    %c0_8 = arith.constant 0 : index
    %7 = vector.load %arg4[%c0_7, %c0_8] : memref<1x128xf32, #tpu.memory_space<vmem>>, vector<1x128xf32>
    %cst_9 = arith.constant 0.000000e+00 : f32
    %8 = vector.broadcast %cst_9 : f32 to vector<1x128xf32>
    %9 = vector.extract_strided_slice %5 {offsets = [0, 0], sizes = [1, 384], strides = [1, 1]} : vector<8x384xf32> to vector<1x384xf32>
    %10 = vector.extract_strided_slice %8 {offsets = [0, 0], sizes = [1, 32], strides = [1, 1]} : vector<1x128xf32> to vector<1x32xf32>
    %cst_10 = arith.constant dense<0.000000e+00> : vector<1x384xf32>
    %11 = tpu.matmul %10, %6, %cst_10 {dimension_numbers = #tpu.dot_dimension_numbers<[1], [0], [0], [1], [0, 0, 1, 1], [], []>} : vector<1x32xf32>, vector<32x384xf32>, vector<1x384xf32> -> vector<1x384xf32>
    %12 = vector.extract_strided_slice %9 {offsets = [0, 0], sizes = [1, 128], strides = [1, 1]} : vector<1x384xf32> to vector<1x128xf32>
    %13 = vector.extract_strided_slice %11 {offsets = [0, 0], sizes = [1, 128], strides = [1, 1]} : vector<1x384xf32> to vector<1x128xf32>
    %14 = arith.addf %12, %13 : vector<1x128xf32>
    %15 = arith.negf %14 : vector<1x128xf32>
    %16 = math.exp %15 : vector<1x128xf32>
    %cst_11 = arith.constant 1.000000e+00 : f32
    %17 = vector.broadcast %cst_11 : f32 to vector<1x128xf32>
    %18 = arith.addf %17, %16 : vector<1x128xf32>
    %19 = arith.divf %17, %18 : vector<1x128xf32>
    %20 = vector.extract_strided_slice %9 {offsets = [0, 128], sizes = [1, 128], strides = [1, 1]} : vector<1x384xf32> to vector<1x128xf32>
    %21 = vector.extract_strided_slice %11 {offsets = [0, 128], sizes = [1, 128], strides = [1, 1]} : vector<1x384xf32> to vector<1x128xf32>
    %22 = arith.addf %20, %21 : vector<1x128xf32>
    %23 = arith.negf %22 : vector<1x128xf32>
    %24 = math.exp %23 : vector<1x128xf32>
    %cst_12 = arith.constant 1.000000e+00 : f32
    %25 = vector.broadcast %cst_12 : f32 to vector<1x128xf32>
    %26 = arith.addf %25, %24 : vector<1x128xf32>
    %27 = arith.divf %25, %26 : vector<1x128xf32>
    %28 = vector.extract_strided_slice %9 {offsets = [0, 256], sizes = [1, 128], strides = [1, 1]} : vector<1x384xf32> to vector<1x128xf32>
    %29 = vector.extract_strided_slice %11 {offsets = [0, 256], sizes = [1, 128], strides = [1, 1]} : vector<1x384xf32> to vector<1x128xf32>
    %30 = arith.addf %29, %7 : vector<1x128xf32>
    %31 = arith.mulf %19, %30 : vector<1x128xf32>
    %32 = arith.addf %28, %31 : vector<1x128xf32>
    %33 = math.tanh %32 : vector<1x128xf32>
    %34 = arith.subf %8, %33 : vector<1x128xf32>
    %35 = arith.mulf %27, %34 : vector<1x128xf32>
    %36 = arith.addf %33, %35 : vector<1x128xf32>
    %37 = vector.extract_strided_slice %5 {offsets = [1, 0], sizes = [1, 384], strides = [1, 1]} : vector<8x384xf32> to vector<1x384xf32>
    %38 = vector.extract_strided_slice %36 {offsets = [0, 0], sizes = [1, 32], strides = [1, 1]} : vector<1x128xf32> to vector<1x32xf32>
    %cst_13 = arith.constant dense<0.000000e+00> : vector<1x384xf32>
    %39 = tpu.matmul %38, %6, %cst_13 {dimension_numbers = #tpu.dot_dimension_numbers<[1], [0], [0], [1], [0, 0, 1, 1], [], []>} : vector<1x32xf32>, vector<32x384xf32>, vector<1x384xf32> -> vector<1x384xf32>
    %40 = vector.extract_strided_slice %37 {offsets = [0, 0], sizes = [1, 128], strides = [1, 1]} : vector<1x384xf32> to vector<1x128xf32>
    %41 = vector.extract_strided_slice %39 {offsets = [0, 0], sizes = [1, 128], strides = [1, 1]} : vector<1x384xf32> to vector<1x128xf32>
    %42 = arith.addf %40, %41 : vector<1x128xf32>
    %43 = arith.negf %42 : vector<1x128xf32>
    %44 = math.exp %43 : vector<1x128xf32>
    %cst_14 = arith.constant 1.000000e+00 : f32
    %45 = vector.broadcast %cst_14 : f32 to vector<1x128xf32>
    %46 = arith.addf %45, %44 : vector<1x128xf32>
    %47 = arith.divf %45, %46 : vector<1x128xf32>
    %48 = vector.extract_strided_slice %37 {offsets = [0, 128], sizes = [1, 128], strides = [1, 1]} : vector<1x384xf32> to vector<1x128xf32>
    %49 = vector.extract_strided_slice %39 {offsets = [0, 128], sizes = [1, 128], strides = [1, 1]} : vector<1x384xf32> to vector<1x128xf32>
    %50 = arith.addf %48, %49 : vector<1x128xf32>
    %51 = arith.negf %50 : vector<1x128xf32>
    %52 = math.exp %51 : vector<1x128xf32>
    %cst_15 = arith.constant 1.000000e+00 : f32
    %53 = vector.broadcast %cst_15 : f32 to vector<1x128xf32>
    %54 = arith.addf %53, %52 : vector<1x128xf32>
    %55 = arith.divf %53, %54 : vector<1x128xf32>
    %56 = vector.extract_strided_slice %37 {offsets = [0, 256], sizes = [1, 128], strides = [1, 1]} : vector<1x384xf32> to vector<1x128xf32>
    %57 = vector.extract_strided_slice %39 {offsets = [0, 256], sizes = [1, 128], strides = [1, 1]} : vector<1x384xf32> to vector<1x128xf32>
    %58 = arith.addf %57, %7 : vector<1x128xf32>
    %59 = arith.mulf %47, %58 : vector<1x128xf32>
    %60 = arith.addf %56, %59 : vector<1x128xf32>
    %61 = math.tanh %60 : vector<1x128xf32>
    %62 = arith.subf %36, %61 : vector<1x128xf32>
    %63 = arith.mulf %55, %62 : vector<1x128xf32>
    %64 = arith.addf %61, %63 : vector<1x128xf32>
    %65 = vector.extract_strided_slice %5 {offsets = [2, 0], sizes = [1, 384], strides = [1, 1]} : vector<8x384xf32> to vector<1x384xf32>
    %66 = vector.extract_strided_slice %64 {offsets = [0, 0], sizes = [1, 32], strides = [1, 1]} : vector<1x128xf32> to vector<1x32xf32>
    %cst_16 = arith.constant dense<0.000000e+00> : vector<1x384xf32>
    %67 = tpu.matmul %66, %6, %cst_16 {dimension_numbers = #tpu.dot_dimension_numbers<[1], [0], [0], [1], [0, 0, 1, 1], [], []>} : vector<1x32xf32>, vector<32x384xf32>, vector<1x384xf32> -> vector<1x384xf32>
    %68 = vector.extract_strided_slice %65 {offsets = [0, 0], sizes = [1, 128], strides = [1, 1]} : vector<1x384xf32> to vector<1x128xf32>
    %69 = vector.extract_strided_slice %67 {offsets = [0, 0], sizes = [1, 128], strides = [1, 1]} : vector<1x384xf32> to vector<1x128xf32>
    %70 = arith.addf %68, %69 : vector<1x128xf32>
    %71 = arith.negf %70 : vector<1x128xf32>
    %72 = math.exp %71 : vector<1x128xf32>
    %cst_17 = arith.constant 1.000000e+00 : f32
    %73 = vector.broadcast %cst_17 : f32 to vector<1x128xf32>
    %74 = arith.addf %73, %72 : vector<1x128xf32>
    %75 = arith.divf %73, %74 : vector<1x128xf32>
    %76 = vector.extract_strided_slice %65 {offsets = [0, 128], sizes = [1, 128], strides = [1, 1]} : vector<1x384xf32> to vector<1x128xf32>
    %77 = vector.extract_strided_slice %67 {offsets = [0, 128], sizes = [1, 128], strides = [1, 1]} : vector<1x384xf32> to vector<1x128xf32>
    %78 = arith.addf %76, %77 : vector<1x128xf32>
    %79 = arith.negf %78 : vector<1x128xf32>
    %80 = math.exp %79 : vector<1x128xf32>
    %cst_18 = arith.constant 1.000000e+00 : f32
    %81 = vector.broadcast %cst_18 : f32 to vector<1x128xf32>
    %82 = arith.addf %81, %80 : vector<1x128xf32>
    %83 = arith.divf %81, %82 : vector<1x128xf32>
    %84 = vector.extract_strided_slice %65 {offsets = [0, 256], sizes = [1, 128], strides = [1, 1]} : vector<1x384xf32> to vector<1x128xf32>
    %85 = vector.extract_strided_slice %67 {offsets = [0, 256], sizes = [1, 128], strides = [1, 1]} : vector<1x384xf32> to vector<1x128xf32>
    %86 = arith.addf %85, %7 : vector<1x128xf32>
    %87 = arith.mulf %75, %86 : vector<1x128xf32>
    %88 = arith.addf %84, %87 : vector<1x128xf32>
    %89 = math.tanh %88 : vector<1x128xf32>
    %90 = arith.subf %64, %89 : vector<1x128xf32>
    %91 = arith.mulf %83, %90 : vector<1x128xf32>
    %92 = arith.addf %89, %91 : vector<1x128xf32>
    %93 = vector.extract_strided_slice %5 {offsets = [3, 0], sizes = [1, 384], strides = [1, 1]} : vector<8x384xf32> to vector<1x384xf32>
    %94 = vector.extract_strided_slice %92 {offsets = [0, 0], sizes = [1, 32], strides = [1, 1]} : vector<1x128xf32> to vector<1x32xf32>
    %cst_19 = arith.constant dense<0.000000e+00> : vector<1x384xf32>
    %95 = tpu.matmul %94, %6, %cst_19 {dimension_numbers = #tpu.dot_dimension_numbers<[1], [0], [0], [1], [0, 0, 1, 1], [], []>} : vector<1x32xf32>, vector<32x384xf32>, vector<1x384xf32> -> vector<1x384xf32>
    %96 = vector.extract_strided_slice %93 {offsets = [0, 0], sizes = [1, 128], strides = [1, 1]} : vector<1x384xf32> to vector<1x128xf32>
    %97 = vector.extract_strided_slice %95 {offsets = [0, 0], sizes = [1, 128], strides = [1, 1]} : vector<1x384xf32> to vector<1x128xf32>
    %98 = arith.addf %96, %97 : vector<1x128xf32>
    %99 = arith.negf %98 : vector<1x128xf32>
    %100 = math.exp %99 : vector<1x128xf32>
    %cst_20 = arith.constant 1.000000e+00 : f32
    %101 = vector.broadcast %cst_20 : f32 to vector<1x128xf32>
    %102 = arith.addf %101, %100 : vector<1x128xf32>
    %103 = arith.divf %101, %102 : vector<1x128xf32>
    %104 = vector.extract_strided_slice %93 {offsets = [0, 128], sizes = [1, 128], strides = [1, 1]} : vector<1x384xf32> to vector<1x128xf32>
    %105 = vector.extract_strided_slice %95 {offsets = [0, 128], sizes = [1, 128], strides = [1, 1]} : vector<1x384xf32> to vector<1x128xf32>
    %106 = arith.addf %104, %105 : vector<1x128xf32>
    %107 = arith.negf %106 : vector<1x128xf32>
    %108 = math.exp %107 : vector<1x128xf32>
    %cst_21 = arith.constant 1.000000e+00 : f32
    %109 = vector.broadcast %cst_21 : f32 to vector<1x128xf32>
    %110 = arith.addf %109, %108 : vector<1x128xf32>
    %111 = arith.divf %109, %110 : vector<1x128xf32>
    %112 = vector.extract_strided_slice %93 {offsets = [0, 256], sizes = [1, 128], strides = [1, 1]} : vector<1x384xf32> to vector<1x128xf32>
    %113 = vector.extract_strided_slice %95 {offsets = [0, 256], sizes = [1, 128], strides = [1, 1]} : vector<1x384xf32> to vector<1x128xf32>
    %114 = arith.addf %113, %7 : vector<1x128xf32>
    %115 = arith.mulf %103, %114 : vector<1x128xf32>
    %116 = arith.addf %112, %115 : vector<1x128xf32>
    %117 = math.tanh %116 : vector<1x128xf32>
    %118 = arith.subf %92, %117 : vector<1x128xf32>
    %119 = arith.mulf %111, %118 : vector<1x128xf32>
    %120 = arith.addf %117, %119 : vector<1x128xf32>
    %121 = vector.extract_strided_slice %5 {offsets = [4, 0], sizes = [1, 384], strides = [1, 1]} : vector<8x384xf32> to vector<1x384xf32>
    %122 = vector.extract_strided_slice %120 {offsets = [0, 0], sizes = [1, 32], strides = [1, 1]} : vector<1x128xf32> to vector<1x32xf32>
    %cst_22 = arith.constant dense<0.000000e+00> : vector<1x384xf32>
    %123 = tpu.matmul %122, %6, %cst_22 {dimension_numbers = #tpu.dot_dimension_numbers<[1], [0], [0], [1], [0, 0, 1, 1], [], []>} : vector<1x32xf32>, vector<32x384xf32>, vector<1x384xf32> -> vector<1x384xf32>
    %124 = vector.extract_strided_slice %121 {offsets = [0, 0], sizes = [1, 128], strides = [1, 1]} : vector<1x384xf32> to vector<1x128xf32>
    %125 = vector.extract_strided_slice %123 {offsets = [0, 0], sizes = [1, 128], strides = [1, 1]} : vector<1x384xf32> to vector<1x128xf32>
    %126 = arith.addf %124, %125 : vector<1x128xf32>
    %127 = arith.negf %126 : vector<1x128xf32>
    %128 = math.exp %127 : vector<1x128xf32>
    %cst_23 = arith.constant 1.000000e+00 : f32
    %129 = vector.broadcast %cst_23 : f32 to vector<1x128xf32>
    %130 = arith.addf %129, %128 : vector<1x128xf32>
    %131 = arith.divf %129, %130 : vector<1x128xf32>
    %132 = vector.extract_strided_slice %121 {offsets = [0, 128], sizes = [1, 128], strides = [1, 1]} : vector<1x384xf32> to vector<1x128xf32>
    %133 = vector.extract_strided_slice %123 {offsets = [0, 128], sizes = [1, 128], strides = [1, 1]} : vector<1x384xf32> to vector<1x128xf32>
    %134 = arith.addf %132, %133 : vector<1x128xf32>
    %135 = arith.negf %134 : vector<1x128xf32>
    %136 = math.exp %135 : vector<1x128xf32>
    %cst_24 = arith.constant 1.000000e+00 : f32
    %137 = vector.broadcast %cst_24 : f32 to vector<1x128xf32>
    %138 = arith.addf %137, %136 : vector<1x128xf32>
    %139 = arith.divf %137, %138 : vector<1x128xf32>
    %140 = vector.extract_strided_slice %121 {offsets = [0, 256], sizes = [1, 128], strides = [1, 1]} : vector<1x384xf32> to vector<1x128xf32>
    %141 = vector.extract_strided_slice %123 {offsets = [0, 256], sizes = [1, 128], strides = [1, 1]} : vector<1x384xf32> to vector<1x128xf32>
    %142 = arith.addf %141, %7 : vector<1x128xf32>
    %143 = arith.mulf %131, %142 : vector<1x128xf32>
    %144 = arith.addf %140, %143 : vector<1x128xf32>
    %145 = math.tanh %144 : vector<1x128xf32>
    %146 = arith.subf %120, %145 : vector<1x128xf32>
    %147 = arith.mulf %139, %146 : vector<1x128xf32>
    %148 = arith.addf %145, %147 : vector<1x128xf32>
    %149 = vector.extract_strided_slice %5 {offsets = [5, 0], sizes = [1, 384], strides = [1, 1]} : vector<8x384xf32> to vector<1x384xf32>
    %150 = vector.extract_strided_slice %148 {offsets = [0, 0], sizes = [1, 32], strides = [1, 1]} : vector<1x128xf32> to vector<1x32xf32>
    %cst_25 = arith.constant dense<0.000000e+00> : vector<1x384xf32>
    %151 = tpu.matmul %150, %6, %cst_25 {dimension_numbers = #tpu.dot_dimension_numbers<[1], [0], [0], [1], [0, 0, 1, 1], [], []>} : vector<1x32xf32>, vector<32x384xf32>, vector<1x384xf32> -> vector<1x384xf32>
    %152 = vector.extract_strided_slice %149 {offsets = [0, 0], sizes = [1, 128], strides = [1, 1]} : vector<1x384xf32> to vector<1x128xf32>
    %153 = vector.extract_strided_slice %151 {offsets = [0, 0], sizes = [1, 128], strides = [1, 1]} : vector<1x384xf32> to vector<1x128xf32>
    %154 = arith.addf %152, %153 : vector<1x128xf32>
    %155 = arith.negf %154 : vector<1x128xf32>
    %156 = math.exp %155 : vector<1x128xf32>
    %cst_26 = arith.constant 1.000000e+00 : f32
    %157 = vector.broadcast %cst_26 : f32 to vector<1x128xf32>
    %158 = arith.addf %157, %156 : vector<1x128xf32>
    %159 = arith.divf %157, %158 : vector<1x128xf32>
    %160 = vector.extract_strided_slice %149 {offsets = [0, 128], sizes = [1, 128], strides = [1, 1]} : vector<1x384xf32> to vector<1x128xf32>
    %161 = vector.extract_strided_slice %151 {offsets = [0, 128], sizes = [1, 128], strides = [1, 1]} : vector<1x384xf32> to vector<1x128xf32>
    %162 = arith.addf %160, %161 : vector<1x128xf32>
    %163 = arith.negf %162 : vector<1x128xf32>
    %164 = math.exp %163 : vector<1x128xf32>
    %cst_27 = arith.constant 1.000000e+00 : f32
    %165 = vector.broadcast %cst_27 : f32 to vector<1x128xf32>
    %166 = arith.addf %165, %164 : vector<1x128xf32>
    %167 = arith.divf %165, %166 : vector<1x128xf32>
    %168 = vector.extract_strided_slice %149 {offsets = [0, 256], sizes = [1, 128], strides = [1, 1]} : vector<1x384xf32> to vector<1x128xf32>
    %169 = vector.extract_strided_slice %151 {offsets = [0, 256], sizes = [1, 128], strides = [1, 1]} : vector<1x384xf32> to vector<1x128xf32>
    %170 = arith.addf %169, %7 : vector<1x128xf32>
    %171 = arith.mulf %159, %170 : vector<1x128xf32>
    %172 = arith.addf %168, %171 : vector<1x128xf32>
    %173 = math.tanh %172 : vector<1x128xf32>
    %174 = arith.subf %148, %173 : vector<1x128xf32>
    %175 = arith.mulf %167, %174 : vector<1x128xf32>
    %176 = arith.addf %173, %175 : vector<1x128xf32>
    %177 = vector.extract_strided_slice %5 {offsets = [6, 0], sizes = [1, 384], strides = [1, 1]} : vector<8x384xf32> to vector<1x384xf32>
    %178 = vector.extract_strided_slice %176 {offsets = [0, 0], sizes = [1, 32], strides = [1, 1]} : vector<1x128xf32> to vector<1x32xf32>
    %cst_28 = arith.constant dense<0.000000e+00> : vector<1x384xf32>
    %179 = tpu.matmul %178, %6, %cst_28 {dimension_numbers = #tpu.dot_dimension_numbers<[1], [0], [0], [1], [0, 0, 1, 1], [], []>} : vector<1x32xf32>, vector<32x384xf32>, vector<1x384xf32> -> vector<1x384xf32>
    %180 = vector.extract_strided_slice %177 {offsets = [0, 0], sizes = [1, 128], strides = [1, 1]} : vector<1x384xf32> to vector<1x128xf32>
    %181 = vector.extract_strided_slice %179 {offsets = [0, 0], sizes = [1, 128], strides = [1, 1]} : vector<1x384xf32> to vector<1x128xf32>
    %182 = arith.addf %180, %181 : vector<1x128xf32>
    %183 = arith.negf %182 : vector<1x128xf32>
    %184 = math.exp %183 : vector<1x128xf32>
    %cst_29 = arith.constant 1.000000e+00 : f32
    %185 = vector.broadcast %cst_29 : f32 to vector<1x128xf32>
    %186 = arith.addf %185, %184 : vector<1x128xf32>
    %187 = arith.divf %185, %186 : vector<1x128xf32>
    %188 = vector.extract_strided_slice %177 {offsets = [0, 128], sizes = [1, 128], strides = [1, 1]} : vector<1x384xf32> to vector<1x128xf32>
    %189 = vector.extract_strided_slice %179 {offsets = [0, 128], sizes = [1, 128], strides = [1, 1]} : vector<1x384xf32> to vector<1x128xf32>
    %190 = arith.addf %188, %189 : vector<1x128xf32>
    %191 = arith.negf %190 : vector<1x128xf32>
    %192 = math.exp %191 : vector<1x128xf32>
    %cst_30 = arith.constant 1.000000e+00 : f32
    %193 = vector.broadcast %cst_30 : f32 to vector<1x128xf32>
    %194 = arith.addf %193, %192 : vector<1x128xf32>
    %195 = arith.divf %193, %194 : vector<1x128xf32>
    %196 = vector.extract_strided_slice %177 {offsets = [0, 256], sizes = [1, 128], strides = [1, 1]} : vector<1x384xf32> to vector<1x128xf32>
    %197 = vector.extract_strided_slice %179 {offsets = [0, 256], sizes = [1, 128], strides = [1, 1]} : vector<1x384xf32> to vector<1x128xf32>
    %198 = arith.addf %197, %7 : vector<1x128xf32>
    %199 = arith.mulf %187, %198 : vector<1x128xf32>
    %200 = arith.addf %196, %199 : vector<1x128xf32>
    %201 = math.tanh %200 : vector<1x128xf32>
    %202 = arith.subf %176, %201 : vector<1x128xf32>
    %203 = arith.mulf %195, %202 : vector<1x128xf32>
    %204 = arith.addf %201, %203 : vector<1x128xf32>
    %205 = vector.extract_strided_slice %5 {offsets = [7, 0], sizes = [1, 384], strides = [1, 1]} : vector<8x384xf32> to vector<1x384xf32>
    %206 = vector.extract_strided_slice %204 {offsets = [0, 0], sizes = [1, 32], strides = [1, 1]} : vector<1x128xf32> to vector<1x32xf32>
    %cst_31 = arith.constant dense<0.000000e+00> : vector<1x384xf32>
    %207 = tpu.matmul %206, %6, %cst_31 {dimension_numbers = #tpu.dot_dimension_numbers<[1], [0], [0], [1], [0, 0, 1, 1], [], []>} : vector<1x32xf32>, vector<32x384xf32>, vector<1x384xf32> -> vector<1x384xf32>
    %208 = vector.extract_strided_slice %205 {offsets = [0, 0], sizes = [1, 128], strides = [1, 1]} : vector<1x384xf32> to vector<1x128xf32>
    %209 = vector.extract_strided_slice %207 {offsets = [0, 0], sizes = [1, 128], strides = [1, 1]} : vector<1x384xf32> to vector<1x128xf32>
    %210 = arith.addf %208, %209 : vector<1x128xf32>
    %211 = arith.negf %210 : vector<1x128xf32>
    %212 = math.exp %211 : vector<1x128xf32>
    %cst_32 = arith.constant 1.000000e+00 : f32
    %213 = vector.broadcast %cst_32 : f32 to vector<1x128xf32>
    %214 = arith.addf %213, %212 : vector<1x128xf32>
    %215 = arith.divf %213, %214 : vector<1x128xf32>
    %216 = vector.extract_strided_slice %205 {offsets = [0, 128], sizes = [1, 128], strides = [1, 1]} : vector<1x384xf32> to vector<1x128xf32>
    %217 = vector.extract_strided_slice %207 {offsets = [0, 128], sizes = [1, 128], strides = [1, 1]} : vector<1x384xf32> to vector<1x128xf32>
    %218 = arith.addf %216, %217 : vector<1x128xf32>
    %219 = arith.negf %218 : vector<1x128xf32>
    %220 = math.exp %219 : vector<1x128xf32>
    %cst_33 = arith.constant 1.000000e+00 : f32
    %221 = vector.broadcast %cst_33 : f32 to vector<1x128xf32>
    %222 = arith.addf %221, %220 : vector<1x128xf32>
    %223 = arith.divf %221, %222 : vector<1x128xf32>
    %224 = vector.extract_strided_slice %205 {offsets = [0, 256], sizes = [1, 128], strides = [1, 1]} : vector<1x384xf32> to vector<1x128xf32>
    %225 = vector.extract_strided_slice %207 {offsets = [0, 256], sizes = [1, 128], strides = [1, 1]} : vector<1x384xf32> to vector<1x128xf32>
    %226 = arith.addf %225, %7 : vector<1x128xf32>
    %227 = arith.mulf %215, %226 : vector<1x128xf32>
    %228 = arith.addf %224, %227 : vector<1x128xf32>
    %229 = math.tanh %228 : vector<1x128xf32>
    %230 = arith.subf %204, %229 : vector<1x128xf32>
    %231 = arith.mulf %223, %230 : vector<1x128xf32>
    %232 = arith.addf %229, %231 : vector<1x128xf32>
    %233 = vector.extract_strided_slice %232 {offsets = [0, 0], sizes = [1, 32], strides = [1, 1]} : vector<1x128xf32> to vector<1x32xf32>
    %c0_34 = arith.constant 0 : index
    %c0_35 = arith.constant 0 : index
    %234 = vector.load %arg5[%c0_34, %c0_35] : memref<32x128xf32, #tpu.memory_space<vmem>>, vector<32x128xf32>
    %cst_36 = arith.constant dense<0.000000e+00> : vector<1x128xf32>
    %235 = tpu.matmul %233, %234, %cst_36 {dimension_numbers = #tpu.dot_dimension_numbers<[1], [0], [0], [1], [0, 0, 1, 1], [], []>} : vector<1x32xf32>, vector<32x128xf32>, vector<1x128xf32> -> vector<1x128xf32>
    %c0_37 = arith.constant 0 : index
    %c0_38 = arith.constant 0 : index
    %236 = vector.load %arg6[%c0_37, %c0_38] : memref<1x128xf32, #tpu.memory_space<vmem>>, vector<1x128xf32>
    %237 = arith.addf %235, %236 : vector<1x128xf32>
    %238 = arith.negf %237 : vector<1x128xf32>
    %239 = math.exp %238 : vector<1x128xf32>
    %cst_39 = arith.constant 1.000000e+00 : f32
    %240 = vector.broadcast %cst_39 : f32 to vector<1x128xf32>
    %241 = arith.addf %240, %239 : vector<1x128xf32>
    %242 = arith.divf %240, %241 : vector<1x128xf32>
    %c0_40 = arith.constant 0 : index
    %c0_41 = arith.constant 0 : index
    %243 = vector.load %arg7[%c0_40, %c0_41] : memref<1x128xf32, #tpu.memory_space<vmem>>, vector<1x128xf32>
    tpu.vector_store %arg7[%c0_40, %c0_41], %242 {strides = array<i32>} : memref<1x128xf32, #tpu.memory_space<vmem>>, vector<1x128xf32>,
    return
  }
}

</mosaic_0001>

<llo_original>
// kernel: tpu_custom_call.1
$region0: #{tpu_custom_call.1}
  #allocation0 [shape = 'u32[]', space=smem, size = 0x4, offset = 0x4, fixed_abs, tag = 'smem constant byte address 0x4 - core index']
  #allocation1 [shape = 'u32[144,128]{1,0:T(1,128)}', space=vmem, size = 0x12000, scoped, tag = 'internal scratch']
  #allocation2 [shape = 'f32[8,384]{1,0:T(8,128)}', space=vmem, size = 0x3000, scoped, tag = 'scratch operand']
  %s0 = inlined_call_operand.vmem [shape: f32[8,4], index: 0, kind: input, shape index: {}]
  %s1 = inlined_call_operand.vmem [shape: f32[4,384], index: 1, kind: input, shape index: {}]
  %s2 = inlined_call_operand.vmem [shape: f32[1,384], index: 2, kind: input, shape index: {}]
  %s3 = inlined_call_operand.hbm [shape: f32[32,384], index: 3, kind: input, shape index: {}]
  %s4 = inlined_call_operand.vmem [shape: f32[1,128], index: 4, kind: input, shape index: {}]
  %s5 = inlined_call_operand.hbm [shape: f32[32,128], index: 5, kind: input, shape index: {}]
  %s6 = inlined_call_operand.vmem [shape: f32[1,128], index: 6, kind: input, shape index: {}]
  %s7 = inlined_call_operand.hbm [shape: f32[1,128], index: 7, kind: output, shape index: {}]
  %s8 = sld [smem:[#allocation0]]
  $region46: #{tpu_custom_call.1} parent=0
    _
  %s10 = ssub.s32 1, %s8
  %s11 = scalar_select 0, %s10, %s8
  $region1: #{tpu_custom_call.1} parent=0
    #allocation3 [shape = 'u8[49152]{0}', space=vmem, size = 0xc000, scoped, tag = 'input window, operand 3, single buffered']
    #allocation4 [shape = 's32[1]{0}', space=sflag, size = 0x4, scoped, tag = 'scoped memory for tpu_custom_call.1']
    #allocation5 [shape = 's32[1]{0}', space=sflag, size = 0x4, scoped, tag = 'scoped memory for tpu_custom_call.1']
    #allocation6 [shape = 'u8[16384]{0}', space=vmem, size = 0x4000, scoped, tag = 'input window, operand 5, single buffered']
    #allocation7 [shape = 's32[1]{0}', space=sflag, size = 0x4, scoped, tag = 'scoped memory for tpu_custom_call.1']
    #allocation8 [shape = 'u8[512]{0}', space=vmem, size = 0x400, scoped, tag = 'output window, operand 0, single buffered']
    %12 = vsyncpa [#allocation4], 0
    %13 = vsyncpa [#allocation7], 0
    %14 = vsyncpa [#allocation5], 0
    // Predicated region
    $region2: #{tpu_custom_call.1} parent=1 // pred_check
      _
    $region3: #{tpu_custom_call.1} parent=1 // pred_check_branch
      %16 = sbr.rel (0) target = $region5
    $region4: #{tpu_custom_call.1} parent=1 // pred_region
      _
    $region5: #{tpu_custom_call.1} parent=1 // pred_fallthru
      _
    // Predicated region
    $region6: #{tpu_custom_call.1} parent=1 // pred_check
      _
    $region7: #{tpu_custom_call.1} parent=1 // pred_check_branch
      %18 = sbr.rel (0) target = $region9
    $region8: #{tpu_custom_call.1} parent=1 // pred_region
      _
    $region9: #{tpu_custom_call.1} parent=1 // pred_fallthru
      _
    // Predicated region
    $region10: #{tpu_custom_call.1} parent=1 // pred_check
      _
    $region11: #{tpu_custom_call.1} parent=1 // pred_check_branch
      %20 = sbr.rel (0) target = $region13
    $region12: #{tpu_custom_call.1} parent=1 // pred_region
      _
    $region13: #{tpu_custom_call.1} parent=1 // pred_fallthru
      _
    // Predicated region
    $region14: #{tpu_custom_call.1} parent=1 // pred_check
      _
    $region15: #{tpu_custom_call.1} parent=1 // pred_check_branch
      %22 = sbr.rel (0) target = $region17
    $region16: #{tpu_custom_call.1} parent=1 // pred_region
      %s24 = ssub.s32 1536, 1536
      %25 = vsyncadd [#allocation4], %s24
      %s26 = sshll.u32 [#allocation3], 4
      %s27 = int_to_ptr.vmem [resolvable:$true] %s26
      %32 = dma.hbm_to_vmem [thread:$0]  %s3, 1536, %s27, [#allocation4], 384, 384, 24
    $region17: #{tpu_custom_call.1} parent=1 // pred_fallthru
      _
    // Predicated region
    $region18: #{tpu_custom_call.1} parent=1 // pred_check
      _
    $region19: #{tpu_custom_call.1} parent=1 // pred_check_branch
      %34 = sbr.rel (0) target = $region21
    $region20: #{tpu_custom_call.1} parent=1 // pred_region
      _
    $region21: #{tpu_custom_call.1} parent=1 // pred_fallthru
      _
    // Predicated region
    $region22: #{tpu_custom_call.1} parent=1 // pred_check
      _
    $region23: #{tpu_custom_call.1} parent=1 // pred_check_branch
      %36 = sbr.rel (0) target = $region25
    $region24: #{tpu_custom_call.1} parent=1 // pred_region
      %s38 = ssub.s32 512, 512
      %39 = vsyncadd [#allocation7], %s38
      %s40 = sshll.u32 [#allocation6], 4
      %s41 = int_to_ptr.vmem [resolvable:$true] %s40
      %46 = dma.hbm_to_vmem [thread:$0]  %s5, 512, %s41, [#allocation7], 128, 128, 8
    $region25: #{tpu_custom_call.1} parent=1 // pred_fallthru
      _
    // Predicated region
    $region26: #{tpu_custom_call.1} parent=1 // pred_check
      _
    $region27: #{tpu_custom_call.1} parent=1 // pred_check_branch
      %48 = sbr.rel (0) target = $region29
    $region28: #{tpu_custom_call.1} parent=1 // pred_region
      _
    $region29: #{tpu_custom_call.1} parent=1 // pred_fallthru
      _
    // Predicated region
    $region30: #{tpu_custom_call.1} parent=1 // pred_check
      _
    $region31: #{tpu_custom_call.1} parent=1 // pred_check_branch
      %50 = sbr.rel (0) target = $region33
    $region32: #{tpu_custom_call.1} parent=1 // pred_region
      %51 = dma.done [#allocation4], 1536
    $region33: #{tpu_custom_call.1} parent=1 // pred_fallthru
      _
    // Predicated region
    $region34: #{tpu_custom_call.1} parent=1 // pred_check
      _
    $region35: #{tpu_custom_call.1} parent=1 // pred_check_branch
      %53 = sbr.rel (0) target = $region37
    $region36: #{tpu_custom_call.1} parent=1 // pred_region
      %54 = dma.done [#allocation7], 512
    $region37: #{tpu_custom_call.1} parent=1 // pred_fallthru
      _
    %v55 = vld [vmem:[%s0] sm:$0xff]
    %v56 = vld [vmem:[%s1] sm:$0xff]
    %v57 = vld [vmem:[%s1 + $0x8] sm:$0xf]
    %v58 = vld [vmem:[%s2] sm:$0x7]
    %v60 = vlaneseq
    %v61 = vshrl.u32 %v60, 7
    %v62 = vsub.s32 0, %v61
    %v63 = vrot.slane %v58, %v62
    %v64 = vlaneseq
    %v65 = vshrl.u32 %v64, 7
    %v66 = vsub.s32 1, %v65
    %v67 = vrot.slane %v58, %v66
    %v68 = vlaneseq
    %v69 = vshrl.u32 %v68, 7
    %v70 = vsub.s32 2, %v69
    %v71 = vrot.slane %v58, %v70
    %v77 = vcombine.high %v56, %v56
    %vm78 = vcmask 31744
    %v80 = vsel %vm78, %v55, 0
    %vm82 = vcmask 1043456
    %v83 = vsel %vm82, %v56, 0
    %v85 = vsel %vm82, %v77, 0
    %v87 = vsel %vm82, %v57, 0
    %89 = vmatprep.subr.mxu0 0.0
    %90 = vmatpush1.msra.mxu0 0.0
    %91 = vmatprep.subr.mxu0 0.0
    %92 = vmatpush1.msra.mxu0 0.0
    %93 = vmatprep.subr.mxu0 0.0
    %94 = vmatpush1.msra.mxu0 0.0
    %95 = vmatprep.subr.mxu0 0.0
    %96 = vmatpush1.msra.mxu0 0.0
    %97 = vmatprep.subr.mxu0 0.0
    %98 = vmatpush1.msra.mxu0 0.0
    %99 = vmatprep.subr.mxu0 0.0
    %100 = vmatpush1.msra.mxu0 0.0
    %101 = vmatprep.subr.mxu0 0.0
    %102 = vmatpush1.msra.mxu0 0.0
    %103 = vmatprep.subr.mxu0 0.0
    %104 = vmatpush1.msra.mxu0 0.0
    %105 = vmatprep.subr.mxu0 0.0
    %106 = vmatpush1.msra.mxu0 0.0
    %107 = vmatprep.subr.mxu0 0.0
    %108 = vmatpush1.msra.mxu0 0.0
    %109 = vmatprep.subr.mxu0 0.0
    %110 = vmatpush1.msra.mxu0 0.0
    %111 = vmatprep.subr.mxu0 0.0
    %112 = vmatpush1.msra.mxu0 0.0
    %113 = vmatprep.subr.mxu0 0.0
    %114 = vmatpush1.msra.mxu0 0.0
    %115 = vmatprep.subr.mxu0 0.0
    %116 = vmatpush1.msra.mxu0 0.0
    %117 = vmatprep.subr.mxu0 0.0
    %118 = vmatpush1.msra.mxu0 0.0
    %119 = vmatprep.subr.mxu0 %v85
    %120 = vmatpush1.msra.mxu0 %v83
    %121 = vmatprep.subr.mxu0 0.0
    %122 = vmatpush2.msra.mxu0 0.0
    %123 = vmatprep.subr.mxu0 0.0
    %124 = vmatpush2.msra.mxu0 0.0
    %125 = vmatprep.subr.mxu0 0.0
    %126 = vmatpush2.msra.mxu0 0.0
    %127 = vmatprep.subr.mxu0 0.0
    %128 = vmatpush2.msra.mxu0 0.0
    %129 = vmatprep.subr.mxu0 0.0
    %130 = vmatpush2.msra.mxu0 0.0
    %131 = vmatprep.subr.mxu0 0.0
    %132 = vmatpush2.msra.mxu0 0.0
    %133 = vmatprep.subr.mxu0 0.0
    %134 = vmatpush2.msra.mxu0 0.0
    %135 = vmatprep.subr.mxu0 0.0
    %136 = vmatpush2.msra.mxu0 0.0
    %137 = vmatprep.subr.mxu0 0.0
    %138 = vmatpush2.msra.mxu0 0.0
    %139 = vmatprep.subr.mxu0 0.0
    %140 = vmatpush2.msra.mxu0 0.0
    %141 = vmatprep.subr.mxu0 0.0
    %142 = vmatpush2.msra.mxu0 0.0
    %143 = vmatprep.subr.mxu0 0.0
    %144 = vmatpush2.msra.mxu0 0.0
    %145 = vmatprep.subr.mxu0 0.0
    %146 = vmatpush2.msra.mxu0 0.0
    %147 = vmatprep.subr.mxu0 0.0
    %148 = vmatpush2.msra.mxu0 0.0
    %149 = vmatprep.subr.mxu0 0.0
    %150 = vmatpush2.msra.mxu0 0.0
    %151 = vmatprep.subr.mxu0 0.0
    %152 = vmatpush2.msra.mxu0 0.0
    %153 = vmatprep.mubr.f32.mxu0 0.0
    %154 = vmatmul.mubr.f32.gmra.mxu0 %v80
    %v155 = vpop.f32.mrf.mxu0
    %v156 = vadd.f32 %v63, %v155
    %v157 = vpop.f32.mrf.mxu0
    %v158 = vadd.f32 %v67, %v157
    %159 = vdwg.mxu0
    %160 = vmatprep.subr.mxu0 0.0
    %161 = vmatpush1.msra.mxu0 0.0
    %162 = vmatprep.subr.mxu0 0.0
    %163 = vmatpush1.msra.mxu0 0.0
    %164 = vmatprep.subr.mxu0 0.0
    %165 = vmatpush1.msra.mxu0 0.0
    %166 = vmatprep.subr.mxu0 0.0
    %167 = vmatpush1.msra.mxu0 0.0
    %168 = vmatprep.subr.mxu0 0.0
    %169 = vmatpush1.msra.mxu0 0.0
    %170 = vmatprep.subr.mxu0 0.0
    %171 = vmatpush1.msra.mxu0 0.0
    %172 = vmatprep.subr.mxu0 0.0
    %173 = vmatpush1.msra.mxu0 0.0
    %174 = vmatprep.subr.mxu0 0.0
    %175 = vmatpush1.msra.mxu0 0.0
    %176 = vmatprep.subr.mxu0 0.0
    %177 = vmatpush1.msra.mxu0 0.0
    %178 = vmatprep.subr.mxu0 0.0
    %179 = vmatpush1.msra.mxu0 0.0
    %180 = vmatprep.subr.mxu0 0.0
    %181 = vmatpush1.msra.mxu0 0.0
    %182 = vmatprep.subr.mxu0 0.0
    %183 = vmatpush1.msra.mxu0 0.0
    %184 = vmatprep.subr.mxu0 0.0
    %185 = vmatpush1.msra.mxu0 0.0
    %186 = vmatprep.subr.mxu0 0.0
    %187 = vmatpush1.msra.mxu0 0.0
    %188 = vmatprep.subr.mxu0 0.0
    %189 = vmatpush1.msra.mxu0 0.0
    %190 = vmatprep.subr.mxu0 0.0
    %191 = vmatpush1.msra.mxu0 %v87
    %192 = vmatprep.subr.mxu0 0.0
    %193 = vmatpush2.msra.mxu0 0.0
    %194 = vmatprep.subr.mxu0 0.0
    %195 = vmatpush2.msra.mxu0 0.0
    %196 = vmatprep.subr.mxu0 0.0
    %197 = vmatpush2.msra.mxu0 0.0
    %198 = vmatprep.subr.mxu0 0.0
    %199 = vmatpush2.msra.mxu0 0.0
    %200 = vmatprep.subr.mxu0 0.0
    %201 = vmatpush2.msra.mxu0 0.0
    %202 = vmatprep.subr.mxu0 0.0
    %203 = vmatpush2.msra.mxu0 0.0
    %204 = vmatprep.subr.mxu0 0.0
    %205 = vmatpush2.msra.mxu0 0.0
    %206 = vmatprep.subr.mxu0 0.0
    %207 = vmatpush2.msra.mxu0 0.0
    %208 = vmatprep.subr.mxu0 0.0
    %209 = vmatpush2.msra.mxu0 0.0
    %210 = vmatprep.subr.mxu0 0.0
    %211 = vmatpush2.msra.mxu0 0.0
    %212 = vmatprep.subr.mxu0 0.0
    %213 = vmatpush2.msra.mxu0 0.0
    %214 = vmatprep.subr.mxu0 0.0
    %215 = vmatpush2.msra.mxu0 0.0
    %216 = vmatprep.subr.mxu0 0.0
    %217 = vmatpush2.msra.mxu0 0.0
    %218 = vmatprep.subr.mxu0 0.0
    %219 = vmatpush2.msra.mxu0 0.0
    %220 = vmatprep.subr.mxu0 0.0
    %221 = vmatpush2.msra.mxu0 0.0
    %222 = vmatprep.subr.mxu0 0.0
    %223 = vmatpush2.msra.mxu0 0.0
    %224 = vmatprep.mubr.f32.mxu0 0.0
    %225 = vmatmul.mubr.f32.gmra.mxu0 %v80
    %v226 = vpop.f32.mrf.mxu0
    %v227 = vadd.f32 %v71, %v226
    %v228 = vpop.f32.mrf.mxu0
    %229 = vdwg.mxu0
    %v230 = vld [vmem:[#allocation3] sm:$0xff]
    %v231 = vld [vmem:[#allocation3 + $0x8] sm:$0xff]
    %v232 = vld [vmem:[#allocation3 + $0x10] sm:$0xff]
    %v233 = vld [vmem:[#allocation3 + $0x18] sm:$0xff]
    %v234 = vld [vmem:[#allocation3 + $0x20] sm:$0xff]
    %v235 = vld [vmem:[#allocation3 + $0x28] sm:$0xff]
    %v236 = vld [vmem:[#allocation3 + $0x30] sm:$0xff]
    %v237 = vld [vmem:[#allocation3 + $0x38] sm:$0xff]
    %v238 = vld [vmem:[#allocation3 + $0x40] sm:$0xff]
    %v239 = vld [vmem:[#allocation3 + $0x48] sm:$0xff]
    %v240 = vld [vmem:[#allocation3 + $0x50] sm:$0xff]
    %v241 = vld [vmem:[#allocation3 + $0x58] sm:$0xff]
    %v242 = vld [vmem:[%s4] sm:$0x1]
    %vm243 = vcmask 261120
    %v245 = vsel %vm243, 0.0, 0
    %247 = vmatprep.subr.mxu0 0.0
    %248 = vmatpush1.msra.mxu0 0.0
    %249 = vmatprep.subr.mxu0 0.0
    %250 = vmatpush1.msra.mxu0 0.0
    %251 = vmatprep.subr.mxu0 0.0
    %252 = vmatpush1.msra.mxu0 0.0
    %253 = vmatprep.subr.mxu0 0.0
    %254 = vmatpush1.msra.mxu0 0.0
    %255 = vmatprep.subr.mxu0 0.0
    %256 = vmatpush1.msra.mxu0 0.0
    %257 = vmatprep.subr.mxu0 0.0
    %258 = vmatpush1.msra.mxu0 0.0
    %259 = vmatprep.subr.mxu0 0.0
    %260 = vmatpush1.msra.mxu0 0.0
    %261 = vmatprep.subr.mxu0 0.0
    %262 = vmatpush1.msra.mxu0 0.0
    %263 = vmatprep.subr.mxu0 0.0
    %264 = vmatpush1.msra.mxu0 0.0
    %265 = vmatprep.subr.mxu0 0.0
    %266 = vmatpush1.msra.mxu0 0.0
    %267 = vmatprep.subr.mxu0 0.0
    %268 = vmatpush1.msra.mxu0 0.0
    %269 = vmatprep.subr.mxu0 0.0
    %270 = vmatpush1.msra.mxu0 0.0
    %271 = vmatprep.subr.mxu0 %v240
    %272 = vmatpush1.msra.mxu0 %v239
    %273 = vmatprep.subr.mxu0 %v237
    %274 = vmatpush1.msra.mxu0 %v236
    %275 = vmatprep.subr.mxu0 %v234
    %276 = vmatpush1.msra.mxu0 %v233
    %277 = vmatprep.subr.mxu0 %v231
    %278 = vmatpush1.msra.mxu0 %v230
    %279 = vmatprep.subr.mxu0 0.0
    %280 = vmatpush2.msra.mxu0 0.0
    %281 = vmatprep.subr.mxu0 0.0
    %282 = vmatpush2.msra.mxu0 0.0
    %283 = vmatprep.subr.mxu0 0.0
    %284 = vmatpush2.msra.mxu0 0.0
    %285 = vmatprep.subr.mxu0 0.0
    %286 = vmatpush2.msra.mxu0 0.0
    %287 = vmatprep.subr.mxu0 0.0
    %288 = vmatpush2.msra.mxu0 0.0
    %289 = vmatprep.subr.mxu0 0.0
    %290 = vmatpush2.msra.mxu0 0.0
    %291 = vmatprep.subr.mxu0 0.0
    %292 = vmatpush2.msra.mxu0 0.0
    %293 = vmatprep.subr.mxu0 0.0
    %294 = vmatpush2.msra.mxu0 0.0
    %295 = vmatprep.subr.mxu0 0.0
    %296 = vmatpush2.msra.mxu0 0.0
    %297 = vmatprep.subr.mxu0 0.0
    %298 = vmatpush2.msra.mxu0 0.0
    %299 = vmatprep.subr.mxu0 0.0
    %300 = vmatpush2.msra.mxu0 0.0
    %301 = vmatprep.subr.mxu0 0.0
    %302 = vmatpush2.msra.mxu0 0.0
    %303 = vmatprep.subr.mxu0 0.0
    %304 = vmatpush2.msra.mxu0 0.0
    %305 = vmatprep.subr.mxu0 0.0
    %306 = vmatpush2.msra.mxu0 0.0
    %307 = vmatprep.subr.mxu0 0.0
    %308 = vmatpush2.msra.mxu0 0.0
    %309 = vmatprep.subr.mxu0 0.0
    %310 = vmatpush2.msra.mxu0 0.0
    %311 = vmatprep.mubr.f32.mxu0 0.0
    %312 = vmatmul.mubr.f32.gmra.mxu0 %v245
    %v313 = vpop.f32.mrf.mxu0
    %v314 = vadd.f32 0.0, %v313
    %v315 = vpop.f32.mrf.mxu0
    %v316 = vadd.f32 0.0, %v315
    %317 = vdwg.mxu0
    %318 = vmatprep.subr.mxu0 0.0
    %319 = vmatpush1.msra.mxu0 0.0
    %320 = vmatprep.subr.mxu0 0.0
    %321 = vmatpush1.msra.mxu0 0.0
    %322 = vmatprep.subr.mxu0 0.0
    %323 = vmatpush1.msra.mxu0 0.0
    %324 = vmatprep.subr.mxu0 0.0
    %325 = vmatpush1.msra.mxu0 0.0
    %326 = vmatprep.subr.mxu0 0.0
    %327 = vmatpush1.msra.mxu0 0.0
    %328 = vmatprep.subr.mxu0 0.0
    %329 = vmatpush1.msra.mxu0 0.0
    %330 = vmatprep.subr.mxu0 0.0
    %331 = vmatpush1.msra.mxu0 0.0
    %332 = vmatprep.subr.mxu0 0.0
    %333 = vmatpush1.msra.mxu0 0.0
    %334 = vmatprep.subr.mxu0 0.0
    %335 = vmatpush1.msra.mxu0 0.0
    %336 = vmatprep.subr.mxu0 0.0
    %337 = vmatpush1.msra.mxu0 0.0
    %338 = vmatprep.subr.mxu0 0.0
    %339 = vmatpush1.msra.mxu0 0.0
    %340 = vmatprep.subr.mxu0 0.0
    %341 = vmatpush1.msra.mxu0 0.0
    %342 = vmatprep.subr.mxu0 0.0
    %343 = vmatpush1.msra.mxu0 %v241
    %344 = vmatprep.subr.mxu0 0.0
    %345 = vmatpush1.msra.mxu0 %v238
    %346 = vmatprep.subr.mxu0 0.0
    %347 = vmatpush1.msra.mxu0 %v235
    %348 = vmatprep.subr.mxu0 0.0
    %349 = vmatpush1.msra.mxu0 %v232
    %350 = vmatprep.subr.mxu0 0.0
    %351 = vmatpush2.msra.mxu0 0.0
    %352 = vmatprep.subr.mxu0 0.0
    %353 = vmatpush2.msra.mxu0 0.0
    %354 = vmatprep.subr.mxu0 0.0
    %355 = vmatpush2.msra.mxu0 0.0
    %356 = vmatprep.subr.mxu0 0.0
    %357 = vmatpush2.msra.mxu0 0.0
    %358 = vmatprep.subr.mxu0 0.0
    %359 = vmatpush2.msra.mxu0 0.0
    %360 = vmatprep.subr.mxu0 0.0
    %361 = vmatpush2.msra.mxu0 0.0
    %362 = vmatprep.subr.mxu0 0.0
    %363 = vmatpush2.msra.mxu0 0.0
    %364 = vmatprep.subr.mxu0 0.0
    %365 = vmatpush2.msra.mxu0 0.0
    %366 = vmatprep.subr.mxu0 0.0
    %367 = vmatpush2.msra.mxu0 0.0
    %368 = vmatprep.subr.mxu0 0.0
    %369 = vmatpush2.msra.mxu0 0.0
    %370 = vmatprep.subr.mxu0 0.0
    %371 = vmatpush2.msra.mxu0 0.0
    %372 = vmatprep.subr.mxu0 0.0
    %373 = vmatpush2.msra.mxu0 0.0
    %374 = vmatprep.subr.mxu0 0.0
    %375 = vmatpush2.msra.mxu0 0.0
    %376 = vmatprep.subr.mxu0 0.0
    %377 = vmatpush2.msra.mxu0 0.0
    %378 = vmatprep.subr.mxu0 0.0
    %379 = vmatpush2.msra.mxu0 0.0
    %380 = vmatprep.subr.mxu0 0.0
    %381 = vmatpush2.msra.mxu0 0.0
    %382 = vmatprep.mubr.f32.mxu0 0.0
    %383 = vmatmul.mubr.f32.gmra.mxu0 %v245
    %v384 = vpop.f32.mrf.mxu0
    %v385 = vadd.f32 0.0, %v384
    %v386 = vpop.f32.mrf.mxu0
    %387 = vdwg.mxu0
    %v388 = vadd.f32 %v156, %v314
    %v389 = vxor.u32 %v388, 2147483648
    %v390 = vmul.f32 %v389, 1.442695
    %v391 = vpow.pop %v390
    %v392 = vadd.f32 %v391, 1.0
    %v393 = vrcp.pop %v392
    %v394 = vmul.f32 1.0, %v393
    %v395 = vadd.f32 %v158, %v316
    %v396 = vxor.u32 %v395, 2147483648
    %v397 = vmul.f32 %v396, 1.442695
    %v398 = vpow.pop %v397
    %v399 = vadd.f32 %v398, 1.0
    %v400 = vrcp.pop %v399
    %v401 = vmul.f32 1.0, %v400
    %v402 = vadd.f32 %v385, %v242
    %v403 = vmul.f32 %v394, %v402
    %v404 = vadd.f32 %v227, %v403
    %v405 = vtanh.pop %v404
    %v406 = vsub.f32 0.0, %v405
    %v407 = vmul.f32 %v401, %v406
    %v408 = vadd.f32 %v405, %v407
    %v410 = vsel %vm243, %v408, 0
    %412 = vmatprep.subr.mxu0 0.0
    %413 = vmatpush1.msra.mxu0 0.0
    %414 = vmatprep.subr.mxu0 0.0
    %415 = vmatpush1.msra.mxu0 0.0
    %416 = vmatprep.subr.mxu0 0.0
    %417 = vmatpush1.msra.mxu0 0.0
    %418 = vmatprep.subr.mxu0 0.0
    %419 = vmatpush1.msra.mxu0 0.0
    %420 = vmatprep.subr.mxu0 0.0
    %421 = vmatpush1.msra.mxu0 0.0
    %422 = vmatprep.subr.mxu0 0.0
    %423 = vmatpush1.msra.mxu0 0.0
    %424 = vmatprep.subr.mxu0 0.0
    %425 = vmatpush1.msra.mxu0 0.0
    %426 = vmatprep.subr.mxu0 0.0
    %427 = vmatpush1.msra.mxu0 0.0
    %428 = vmatprep.subr.mxu0 0.0
    %429 = vmatpush1.msra.mxu0 0.0
    %430 = vmatprep.subr.mxu0 0.0
    %431 = vmatpush1.msra.mxu0 0.0
    %432 = vmatprep.subr.mxu0 0.0
    %433 = vmatpush1.msra.mxu0 0.0
    %434 = vmatprep.subr.mxu0 0.0
    %435 = vmatpush1.msra.mxu0 0.0
    %436 = vmatprep.subr.mxu0 %v240
    %437 = vmatpush1.msra.mxu0 %v239
    %438 = vmatprep.subr.mxu0 %v237
    %439 = vmatpush1.msra.mxu0 %v236
    %440 = vmatprep.subr.mxu0 %v234
    %441 = vmatpush1.msra.mxu0 %v233
    %442 = vmatprep.subr.mxu0 %v231
    %443 = vmatpush1.msra.mxu0 %v230
    %444 = vmatprep.subr.mxu0 0.0
    %445 = vmatpush2.msra.mxu0 0.0
    %446 = vmatprep.subr.mxu0 0.0
    %447 = vmatpush2.msra.mxu0 0.0
    %448 = vmatprep.subr.mxu0 0.0
    %449 = vmatpush2.msra.mxu0 0.0
    %450 = vmatprep.subr.mxu0 0.0
    %451 = vmatpush2.msra.mxu0 0.0
    %452 = vmatprep.subr.mxu0 0.0
    %453 = vmatpush2.msra.mxu0 0.0
    %454 = vmatprep.subr.mxu0 0.0
    %455 = vmatpush2.msra.mxu0 0.0
    %456 = vmatprep.subr.mxu0 0.0
    %457 = vmatpush2.msra.mxu0 0.0
    %458 = vmatprep.subr.mxu0 0.0
    %459 = vmatpush2.msra.mxu0 0.0
    %460 = vmatprep.subr.mxu0 0.0
    %461 = vmatpush2.msra.mxu0 0.0
    %462 = vmatprep.subr.mxu0 0.0
    %463 = vmatpush2.msra.mxu0 0.0
    %464 = vmatprep.subr.mxu0 0.0
    %465 = vmatpush2.msra.mxu0 0.0
    %466 = vmatprep.subr.mxu0 0.0
    %467 = vmatpush2.msra.mxu0 0.0
    %468 = vmatprep.subr.mxu0 0.0
    %469 = vmatpush2.msra.mxu0 0.0
    %470 = vmatprep.subr.mxu0 0.0
    %471 = vmatpush2.msra.mxu0 0.0
    %472 = vmatprep.subr.mxu0 0.0
    %473 = vmatpush2.msra.mxu0 0.0
    %474 = vmatprep.subr.mxu0 0.0
    %475 = vmatpush2.msra.mxu0 0.0
    %476 = vmatprep.mubr.f32.mxu0 0.0
    %477 = vmatmul.mubr.f32.gmra.mxu0 %v410
    %v478 = vpop.f32.mrf.mxu0
    %v479 = vadd.f32 0.0, %v478
    %v480 = vpop.f32.mrf.mxu0
    %v481 = vadd.f32 0.0, %v480
    %482 = vdwg.mxu0
    %483 = vmatprep.subr.mxu0 0.0
    %484 = vmatpush1.msra.mxu0 0.0
    %485 = vmatprep.subr.mxu0 0.0
    %486 = vmatpush1.msra.mxu0 0.0
    %487 = vmatprep.subr.mxu0 0.0
    %488 = vmatpush1.msra.mxu0 0.0
    %489 = vmatprep.subr.mxu0 0.0
    %490 = vmatpush1.msra.mxu0 0.0
    %491 = vmatprep.subr.mxu0 0.0
    %492 = vmatpush1.msra.mxu0 0.0
    %493 = vmatprep.subr.mxu0 0.0
    %494 = vmatpush1.msra.mxu0 0.0
    %495 = vmatprep.subr.mxu0 0.0
    %496 = vmatpush1.msra.mxu0 0.0
    %497 = vmatprep.subr.mxu0 0.0
    %498 = vmatpush1.msra.mxu0 0.0
    %499 = vmatprep.subr.mxu0 0.0
    %500 = vmatpush1.msra.mxu0 0.0
    %501 = vmatprep.subr.mxu0 0.0
    %502 = vmatpush1.msra.mxu0 0.0
    %503 = vmatprep.subr.mxu0 0.0
    %504 = vmatpush1.msra.mxu0 0.0
    %505 = vmatprep.subr.mxu0 0.0
    %506 = vmatpush1.msra.mxu0 0.0
    %507 = vmatprep.subr.mxu0 0.0
    %508 = vmatpush1.msra.mxu0 %v241
    %509 = vmatprep.subr.mxu0 0.0
    %510 = vmatpush1.msra.mxu0 %v238
    %511 = vmatprep.subr.mxu0 0.0
    %512 = vmatpush1.msra.mxu0 %v235
    %513 = vmatprep.subr.mxu0 0.0
    %514 = vmatpush1.msra.mxu0 %v232
    %515 = vmatprep.subr.mxu0 0.0
    %516 = vmatpush2.msra.mxu0 0.0
    %517 = vmatprep.subr.mxu0 0.0
    %518 = vmatpush2.msra.mxu0 0.0
    %519 = vmatprep.subr.mxu0 0.0
    %520 = vmatpush2.msra.mxu0 0.0
    %521 = vmatprep.subr.mxu0 0.0
    %522 = vmatpush2.msra.mxu0 0.0
    %523 = vmatprep.subr.mxu0 0.0
    %524 = vmatpush2.msra.mxu0 0.0
    %525 = vmatprep.subr.mxu0 0.0
    %526 = vmatpush2.msra.mxu0 0.0
    %527 = vmatprep.subr.mxu0 0.0
    %528 = vmatpush2.msra.mxu0 0.0
    %529 = vmatprep.subr.mxu0 0.0
    %530 = vmatpush2.msra.mxu0 0.0
    %531 = vmatprep.subr.mxu0 0.0
    %532 = vmatpush2.msra.mxu0 0.0
    %533 = vmatprep.subr.mxu0 0.0
    %534 = vmatpush2.msra.mxu0 0.0
    %535 = vmatprep.subr.mxu0 0.0
    %536 = vmatpush2.msra.mxu0 0.0
    %537 = vmatprep.subr.mxu0 0.0
    %538 = vmatpush2.msra.mxu0 0.0
    %539 = vmatprep.subr.mxu0 0.0
    %540 = vmatpush2.msra.mxu0 0.0
    %541 = vmatprep.subr.mxu0 0.0
    %542 = vmatpush2.msra.mxu0 0.0
    %543 = vmatprep.subr.mxu0 0.0
    %544 = vmatpush2.msra.mxu0 0.0
    %545 = vmatprep.subr.mxu0 0.0
    %546 = vmatpush2.msra.mxu0 0.0
    %547 = vmatprep.mubr.f32.mxu0 0.0
    %548 = vmatmul.mubr.f32.gmra.mxu0 %v410
    %v549 = vpop.f32.mrf.mxu0
    %v550 = vadd.f32 0.0, %v549
    %v551 = vpop.f32.mrf.mxu0
    %552 = vdwg.mxu0
    %v554 = vrot.slane %v479, 7
    %v556 = vadd.f32 %v156, %v554
    %v557 = vxor.u32 %v556, 2147483648
    %v558 = vmul.f32 %v557, 1.442695
    %v559 = vpow.pop %v558
    %v560 = vadd.f32 %v559, 1.0
    %v561 = vrcp.pop %v560
    %v562 = vmul.f32 1.0, %v561
    %v564 = vrot.slane %v481, 7
    %v566 = vadd.f32 %v158, %v564
    %v567 = vxor.u32 %v566, 2147483648
    %v568 = vmul.f32 %v567, 1.442695
    %v569 = vpow.pop %v568
    %v570 = vadd.f32 %v569, 1.0
    %v571 = vrcp.pop %v570
    %v572 = vmul.f32 1.0, %v571
    %v573 = vadd.f32 %v550, %v242
    %v575 = vrot.slane %v573, 7
    %v577 = vmul.f32 %v562, %v575
    %v578 = vadd.f32 %v227, %v577
    %v579 = vtanh.pop %v578
    %v581 = vrot.slane %v579, 1
    %v583 = vsub.f32 %v408, %v581
    %v585 = vrot.slane %v583, 7
    %v587 = vmul.f32 %v572, %v585
    %v588 = vadd.f32 %v579, %v587
    %v590 = vrot.slane %v588, 1
    %v591 = vsel %vm243, %v590, 0
    %593 = vmatprep.subr.mxu0 0.0
    %594 = vmatpush1.msra.mxu0 0.0
    %595 = vmatprep.subr.mxu0 0.0
    %596 = vmatpush1.msra.mxu0 0.0
    %597 = vmatprep.subr.mxu0 0.0
    %598 = vmatpush1.msra.mxu0 0.0
    %599 = vmatprep.subr.mxu0 0.0
    %600 = vmatpush1.msra.mxu0 0.0
    %601 = vmatprep.subr.mxu0 0.0
    %602 = vmatpush1.msra.mxu0 0.0
    %603 = vmatprep.subr.mxu0 0.0
    %604 = vmatpush1.msra.mxu0 0.0
    %605 = vmatprep.subr.mxu0 0.0
    %606 = vmatpush1.msra.mxu0 0.0
    %607 = vmatprep.subr.mxu0 0.0
    %608 = vmatpush1.msra.mxu0 0.0
    %609 = vmatprep.subr.mxu0 0.0
    %610 = vmatpush1.msra.mxu0 0.0
    %611 = vmatprep.subr.mxu0 0.0
    %612 = vmatpush1.msra.mxu0 0.0
    %613 = vmatprep.subr.mxu0 0.0
    %614 = vmatpush1.msra.mxu0 0.0
    %615 = vmatprep.subr.mxu0 0.0
    %616 = vmatpush1.msra.mxu0 0.0
    %617 = vmatprep.subr.mxu0 %v240
    %618 = vmatpush1.msra.mxu0 %v239
    %619 = vmatprep.subr.mxu0 %v237
    %620 = vmatpush1.msra.mxu0 %v236
    %621 = vmatprep.subr.mxu0 %v234
    %622 = vmatpush1.msra.mxu0 %v233
    %623 = vmatprep.subr.mxu0 %v231
    %624 = vmatpush1.msra.mxu0 %v230
    %625 = vmatprep.subr.mxu0 0.0
    %626 = vmatpush2.msra.mxu0 0.0
    %627 = vmatprep.subr.mxu0 0.0
    %628 = vmatpush2.msra.mxu0 0.0
    %629 = vmatprep.subr.mxu0 0.0
    %630 = vmatpush2.msra.mxu0 0.0
    %631 = vmatprep.subr.mxu0 0.0
    %632 = vmatpush2.msra.mxu0 0.0
    %633 = vmatprep.subr.mxu0 0.0
    %634 = vmatpush2.msra.mxu0 0.0
    %635 = vmatprep.subr.mxu0 0.0
    %636 = vmatpush2.msra.mxu0 0.0
    %637 = vmatprep.subr.mxu0 0.0
    %638 = vmatpush2.msra.mxu0 0.0
    %639 = vmatprep.subr.mxu0 0.0
    %640 = vmatpush2.msra.mxu0 0.0
    %641 = vmatprep.subr.mxu0 0.0
    %642 = vmatpush2.msra.mxu0 0.0
    %643 = vmatprep.subr.mxu0 0.0
    %644 = vmatpush2.msra.mxu0 0.0
    %645 = vmatprep.subr.mxu0 0.0
    %646 = vmatpush2.msra.mxu0 0.0
    %647 = vmatprep.subr.mxu0 0.0
    %648 = vmatpush2.msra.mxu0 0.0
    %649 = vmatprep.subr.mxu0 0.0
    %650 = vmatpush2.msra.mxu0 0.0
    %651 = vmatprep.subr.mxu0 0.0
    %652 = vmatpush2.msra.mxu0 0.0
    %653 = vmatprep.subr.mxu0 0.0
    %654 = vmatpush2.msra.mxu0 0.0
    %655 = vmatprep.subr.mxu0 0.0
    %656 = vmatpush2.msra.mxu0 0.0
    %657 = vmatprep.mubr.f32.mxu0 0.0
    %658 = vmatmul.mubr.f32.gmra.mxu0 %v591
    %v659 = vpop.f32.mrf.mxu0
    %v660 = vadd.f32 0.0, %v659
    %v661 = vpop.f32.mrf.mxu0
    %v662 = vadd.f32 0.0, %v661
    %663 = vdwg.mxu0
    %664 = vmatprep.subr.mxu0 0.0
    %665 = vmatpush1.msra.mxu0 0.0
    %666 = vmatprep.subr.mxu0 0.0
    %667 = vmatpush1.msra.mxu0 0.0
    %668 = vmatprep.subr.mxu0 0.0
    %669 = vmatpush1.msra.mxu0 0.0
    %670 = vmatprep.subr.mxu0 0.0
    %671 = vmatpush1.msra.mxu0 0.0
    %672 = vmatprep.subr.mxu0 0.0
    %673 = vmatpush1.msra.mxu0 0.0
    %674 = vmatprep.subr.mxu0 0.0
    %675 = vmatpush1.msra.mxu0 0.0
    %676 = vmatprep.subr.mxu0 0.0
    %677 = vmatpush1.msra.mxu0 0.0
    %678 = vmatprep.subr.mxu0 0.0
    %679 = vmatpush1.msra.mxu0 0.0
    %680 = vmatprep.subr.mxu0 0.0
    %681 = vmatpush1.msra.mxu0 0.0
    %682 = vmatprep.subr.mxu0 0.0
    %683 = vmatpush1.msra.mxu0 0.0
    %684 = vmatprep.subr.mxu0 0.0
    %685 = vmatpush1.msra.mxu0 0.0
    %686 = vmatprep.subr.mxu0 0.0
    %687 = vmatpush1.msra.mxu0 0.0
    %688 = vmatprep.subr.mxu0 0.0
    %689 = vmatpush1.msra.mxu0 %v241
    %690 = vmatprep.subr.mxu0 0.0
    %691 = vmatpush1.msra.mxu0 %v238
    %692 = vmatprep.subr.mxu0 0.0
    %693 = vmatpush1.msra.mxu0 %v235
    %694 = vmatprep.subr.mxu0 0.0
    %695 = vmatpush1.msra.mxu0 %v232
    %696 = vmatprep.subr.mxu0 0.0
    %697 = vmatpush2.msra.mxu0 0.0
    %698 = vmatprep.subr.mxu0 0.0
    %699 = vmatpush2.msra.mxu0 0.0
    %700 = vmatprep.subr.mxu0 0.0
    %701 = vmatpush2.msra.mxu0 0.0
    %702 = vmatprep.subr.mxu0 0.0
    %703 = vmatpush2.msra.mxu0 0.0
    %704 = vmatprep.subr.mxu0 0.0
    %705 = vmatpush2.msra.mxu0 0.0
    %706 = vmatprep.subr.mxu0 0.0
    %707 = vmatpush2.msra.mxu0 0.0
    %708 = vmatprep.subr.mxu0 0.0
    %709 = vmatpush2.msra.mxu0 0.0
    %710 = vmatprep.subr.mxu0 0.0
    %711 = vmatpush2.msra.mxu0 0.0
    %712 = vmatprep.subr.mxu0 0.0
    %713 = vmatpush2.msra.mxu0 0.0
    %714 = vmatprep.subr.mxu0 0.0
    %715 = vmatpush2.msra.mxu0 0.0
    %716 = vmatprep.subr.mxu0 0.0
    %717 = vmatpush2.msra.mxu0 0.0
    %718 = vmatprep.subr.mxu0 0.0
    %719 = vmatpush2.msra.mxu0 0.0
    %720 = vmatprep.subr.mxu0 0.0
    %721 = vmatpush2.msra.mxu0 0.0
    %722 = vmatprep.subr.mxu0 0.0
    %723 = vmatpush2.msra.mxu0 0.0
    %724 = vmatprep.subr.mxu0 0.0
    %725 = vmatpush2.msra.mxu0 0.0
    %726 = vmatprep.subr.mxu0 0.0
    %727 = vmatpush2.msra.mxu0 0.0
    %728 = vmatprep.mubr.f32.mxu0 0.0
    %729 = vmatmul.mubr.f32.gmra.mxu0 %v591
    %v730 = vpop.f32.mrf.mxu0
    %v731 = vadd.f32 0.0, %v730
    %v732 = vpop.f32.mrf.mxu0
    %733 = vdwg.mxu0
    %v735 = vrot.slane %v660, 6
    %v737 = vadd.f32 %v156, %v735
    %v738 = vxor.u32 %v737, 2147483648
    %v739 = vmul.f32 %v738, 1.442695
    %v740 = vpow.pop %v739
    %v741 = vadd.f32 %v740, 1.0
    %v742 = vrcp.pop %v741
    %v743 = vmul.f32 1.0, %v742
    %v745 = vrot.slane %v662, 6
    %v747 = vadd.f32 %v158, %v745
    %v748 = vxor.u32 %v747, 2147483648
    %v749 = vmul.f32 %v748, 1.442695
    %v750 = vpow.pop %v749
    %v751 = vadd.f32 %v750, 1.0
    %v752 = vrcp.pop %v751
    %v753 = vmul.f32 1.0, %v752
    %v754 = vadd.f32 %v731, %v242
    %v756 = vrot.slane %v754, 6
    %v758 = vmul.f32 %v743, %v756
    %v759 = vadd.f32 %v227, %v758
    %v760 = vtanh.pop %v759
    %v762 = vrot.slane %v760, 1
    %v764 = vsub.f32 %v588, %v762
    %v766 = vrot.slane %v764, 7
    %v768 = vmul.f32 %v753, %v766
    %v769 = vadd.f32 %v760, %v768
    %v771 = vrot.slane %v769, 2
    %v772 = vsel %vm243, %v771, 0
    %774 = vmatprep.subr.mxu0 0.0
    %775 = vmatpush1.msra.mxu0 0.0
    %776 = vmatprep.subr.mxu0 0.0
    %777 = vmatpush1.msra.mxu0 0.0
    %778 = vmatprep.subr.mxu0 0.0
    %779 = vmatpush1.msra.mxu0 0.0
    %780 = vmatprep.subr.mxu0 0.0
    %781 = vmatpush1.msra.mxu0 0.0
    %782 = vmatprep.subr.mxu0 0.0
    %783 = vmatpush1.msra.mxu0 0.0
    %784 = vmatprep.subr.mxu0 0.0
    %785 = vmatpush1.msra.mxu0 0.0
    %786 = vmatprep.subr.mxu0 0.0
    %787 = vmatpush1.msra.mxu0 0.0
    %788 = vmatprep.subr.mxu0 0.0
    %789 = vmatpush1.msra.mxu0 0.0
    %790 = vmatprep.subr.mxu0 0.0
    %791 = vmatpush1.msra.mxu0 0.0
    %792 = vmatprep.subr.mxu0 0.0
    %793 = vmatpush1.msra.mxu0 0.0
    %794 = vmatprep.subr.mxu0 0.0
    %795 = vmatpush1.msra.mxu0 0.0
    %796 = vmatprep.subr.mxu0 0.0
    %797 = vmatpush1.msra.mxu0 0.0
    %798 = vmatprep.subr.mxu0 %v240
    %799 = vmatpush1.msra.mxu0 %v239
    %800 = vmatprep.subr.mxu0 %v237
    %801 = vmatpush1.msra.mxu0 %v236
    %802 = vmatprep.subr.mxu0 %v234
    %803 = vmatpush1.msra.mxu0 %v233
    %804 = vmatprep.subr.mxu0 %v231
    %805 = vmatpush1.msra.mxu0 %v230
    %806 = vmatprep.subr.mxu0 0.0
    %807 = vmatpush2.msra.mxu0 0.0
    %808 = vmatprep.subr.mxu0 0.0
    %809 = vmatpush2.msra.mxu0 0.0
    %810 = vmatprep.subr.mxu0 0.0
    %811 = vmatpush2.msra.mxu0 0.0
    %812 = vmatprep.subr.mxu0 0.0
    %813 = vmatpush2.msra.mxu0 0.0
    %814 = vmatprep.subr.mxu0 0.0
    %815 = vmatpush2.msra.mxu0 0.0
    %816 = vmatprep.subr.mxu0 0.0
    %817 = vmatpush2.msra.mxu0 0.0
    %818 = vmatprep.subr.mxu0 0.0
    %819 = vmatpush2.msra.mxu0 0.0
    %820 = vmatprep.subr.mxu0 0.0
    %821 = vmatpush2.msra.mxu0 0.0
    %822 = vmatprep.subr.mxu0 0.0
    %823 = vmatpush2.msra.mxu0 0.0
    %824 = vmatprep.subr.mxu0 0.0
    %825 = vmatpush2.msra.mxu0 0.0
    %826 = vmatprep.subr.mxu0 0.0
    %827 = vmatpush2.msra.mxu0 0.0
    %828 = vmatprep.subr.mxu0 0.0
    %829 = vmatpush2.msra.mxu0 0.0
    %830 = vmatprep.subr.mxu0 0.0
    %831 = vmatpush2.msra.mxu0 0.0
    %832 = vmatprep.subr.mxu0 0.0
    %833 = vmatpush2.msra.mxu0 0.0
    %834 = vmatprep.subr.mxu0 0.0
    %835 = vmatpush2.msra.mxu0 0.0
    %836 = vmatprep.subr.mxu0 0.0
    %837 = vmatpush2.msra.mxu0 0.0
    %838 = vmatprep.mubr.f32.mxu0 0.0
    %839 = vmatmul.mubr.f32.gmra.mxu0 %v772
    %v840 = vpop.f32.mrf.mxu0
    %v841 = vadd.f32 0.0, %v840
    %v842 = vpop.f32.mrf.mxu0
    %v843 = vadd.f32 0.0, %v842
    %844 = vdwg.mxu0
    %845 = vmatprep.subr.mxu0 0.0
    %846 = vmatpush1.msra.mxu0 0.0
    %847 = vmatprep.subr.mxu0 0.0
    %848 = vmatpush1.msra.mxu0 0.0
    %849 = vmatprep.subr.mxu0 0.0
    %850 = vmatpush1.msra.mxu0 0.0
    %851 = vmatprep.subr.mxu0 0.0
    %852 = vmatpush1.msra.mxu0 0.0
    %853 = vmatprep.subr.mxu0 0.0
    %854 = vmatpush1.msra.mxu0 0.0
    %855 = vmatprep.subr.mxu0 0.0
    %856 = vmatpush1.msra.mxu0 0.0
    %857 = vmatprep.subr.mxu0 0.0
    %858 = vmatpush1.msra.mxu0 0.0
    %859 = vmatprep.subr.mxu0 0.0
    %860 = vmatpush1.msra.mxu0 0.0
    %861 = vmatprep.subr.mxu0 0.0
    %862 = vmatpush1.msra.mxu0 0.0
    %863 = vmatprep.subr.mxu0 0.0
    %864 = vmatpush1.msra.mxu0 0.0
    %865 = vmatprep.subr.mxu0 0.0
    %866 = vmatpush1.msra.mxu0 0.0
    %867 = vmatprep.subr.mxu0 0.0
    %868 = vmatpush1.msra.mxu0 0.0
    %869 = vmatprep.subr.mxu0 0.0
    %870 = vmatpush1.msra.mxu0 %v241
    %871 = vmatprep.subr.mxu0 0.0
    %872 = vmatpush1.msra.mxu0 %v238
    %873 = vmatprep.subr.mxu0 0.0
    %874 = vmatpush1.msra.mxu0 %v235
    %875 = vmatprep.subr.mxu0 0.0
    %876 = vmatpush1.msra.mxu0 %v232
    %877 = vmatprep.subr.mxu0 0.0
    %878 = vmatpush2.msra.mxu0 0.0
    %879 = vmatprep.subr.mxu0 0.0
    %880 = vmatpush2.msra.mxu0 0.0
    %881 = vmatprep.subr.mxu0 0.0
    %882 = vmatpush2.msra.mxu0 0.0
    %883 = vmatprep.subr.mxu0 0.0
    %884 = vmatpush2.msra.mxu0 0.0
    %885 = vmatprep.subr.mxu0 0.0
    %886 = vmatpush2.msra.mxu0 0.0
    %887 = vmatprep.subr.mxu0 0.0
    %888 = vmatpush2.msra.mxu0 0.0
    %889 = vmatprep.subr.mxu0 0.0
    %890 = vmatpush2.msra.mxu0 0.0
    %891 = vmatprep.subr.mxu0 0.0
    %892 = vmatpush2.msra.mxu0 0.0
    %893 = vmatprep.subr.mxu0 0.0
    %894 = vmatpush2.msra.mxu0 0.0
    %895 = vmatprep.subr.mxu0 0.0
    %896 = vmatpush2.msra.mxu0 0.0
    %897 = vmatprep.subr.mxu0 0.0
    %898 = vmatpush2.msra.mxu0 0.0
    %899 = vmatprep.subr.mxu0 0.0
    %900 = vmatpush2.msra.mxu0 0.0
    %901 = vmatprep.subr.mxu0 0.0
    %902 = vmatpush2.msra.mxu0 0.0
    %903 = vmatprep.subr.mxu0 0.0
    %904 = vmatpush2.msra.mxu0 0.0
    %905 = vmatprep.subr.mxu0 0.0
    %906 = vmatpush2.msra.mxu0 0.0
    %907 = vmatprep.subr.mxu0 0.0
    %908 = vmatpush2.msra.mxu0 0.0
    %909 = vmatprep.mubr.f32.mxu0 0.0
    %910 = vmatmul.mubr.f32.gmra.mxu0 %v772
    %v911 = vpop.f32.mrf.mxu0
    %v912 = vadd.f32 0.0, %v911
    %v913 = vpop.f32.mrf.mxu0
    %914 = vdwg.mxu0
    %v916 = vrot.slane %v841, 5
    %v918 = vadd.f32 %v156, %v916
    %v919 = vxor.u32 %v918, 2147483648
    %v920 = vmul.f32 %v919, 1.442695
    %v921 = vpow.pop %v920
    %v922 = vadd.f32 %v921, 1.0
    %v923 = vrcp.pop %v922
    %v924 = vmul.f32 1.0, %v923
    %v926 = vrot.slane %v843, 5
    %v928 = vadd.f32 %v158, %v926
    %v929 = vxor.u32 %v928, 2147483648
    %v930 = vmul.f32 %v929, 1.442695
    %v931 = vpow.pop %v930
    %v932 = vadd.f32 %v931, 1.0
    %v933 = vrcp.pop %v932
    %v934 = vmul.f32 1.0, %v933
    %v935 = vadd.f32 %v912, %v242
    %v937 = vrot.slane %v935, 5
    %v939 = vmul.f32 %v924, %v937
    %v940 = vadd.f32 %v227, %v939
    %v941 = vtanh.pop %v940
    %v943 = vrot.slane %v941, 1
    %v945 = vsub.f32 %v769, %v943
    %v947 = vrot.slane %v945, 7
    %v949 = vmul.f32 %v934, %v947
    %v950 = vadd.f32 %v941, %v949
    %v952 = vrot.slane %v950, 3
    %v953 = vsel %vm243, %v952, 0
    %955 = vmatprep.subr.mxu0 0.0
    %956 = vmatpush1.msra.mxu0 0.0
    %957 = vmatprep.subr.mxu0 0.0
    %958 = vmatpush1.msra.mxu0 0.0
    %959 = vmatprep.subr.mxu0 0.0
    %960 = vmatpush1.msra.mxu0 0.0
    %961 = vmatprep.subr.mxu0 0.0
    %962 = vmatpush1.msra.mxu0 0.0
    %963 = vmatprep.subr.mxu0 0.0
    %964 = vmatpush1.msra.mxu0 0.0
    %965 = vmatprep.subr.mxu0 0.0
    %966 = vmatpush1.msra.mxu0 0.0
    %967 = vmatprep.subr.mxu0 0.0
    %968 = vmatpush1.msra.mxu0 0.0
    %969 = vmatprep.subr.mxu0 0.0
    %970 = vmatpush1.msra.mxu0 0.0
    %971 = vmatprep.subr.mxu0 0.0
    %972 = vmatpush1.msra.mxu0 0.0
    %973 = vmatprep.subr.mxu0 0.0
    %974 = vmatpush1.msra.mxu0 0.0
    %975 = vmatprep.subr.mxu0 0.0
    %976 = vmatpush1.msra.mxu0 0.0
    %977 = vmatprep.subr.mxu0 0.0
    %978 = vmatpush1.msra.mxu0 0.0
    %979 = vmatprep.subr.mxu0 %v240
    %980 = vmatpush1.msra.mxu0 %v239
    %981 = vmatprep.subr.mxu0 %v237
    %982 = vmatpush1.msra.mxu0 %v236
    %983 = vmatprep.subr.mxu0 %v234
    %984 = vmatpush1.msra.mxu0 %v233
    %985 = vmatprep.subr.mxu0 %v231
    %986 = vmatpush1.msra.mxu0 %v230
    %987 = vmatprep.subr.mxu0 0.0
    %988 = vmatpush2.msra.mxu0 0.0
    %989 = vmatprep.subr.mxu0 0.0
    %990 = vmatpush2.msra.mxu0 0.0
    %991 = vmatprep.subr.mxu0 0.0
    %992 = vmatpush2.msra.mxu0 0.0
    %993 = vmatprep.subr.mxu0 0.0
    %994 = vmatpush2.msra.mxu0 0.0
    %995 = vmatprep.subr.mxu0 0.0
    %996 = vmatpush2.msra.mxu0 0.0
    %997 = vmatprep.subr.mxu0 0.0
    %998 = vmatpush2.msra.mxu0 0.0
    %999 = vmatprep.subr.mxu0 0.0
    %1000 = vmatpush2.msra.mxu0 0.0
    %1001 = vmatprep.subr.mxu0 0.0
    %1002 = vmatpush2.msra.mxu0 0.0
    %1003 = vmatprep.subr.mxu0 0.0
    %1004 = vmatpush2.msra.mxu0 0.0
    %1005 = vmatprep.subr.mxu0 0.0
    %1006 = vmatpush2.msra.mxu0 0.0
    %1007 = vmatprep.subr.mxu0 0.0
    %1008 = vmatpush2.msra.mxu0 0.0
    %1009 = vmatprep.subr.mxu0 0.0
    %1010 = vmatpush2.msra.mxu0 0.0
    %1011 = vmatprep.subr.mxu0 0.0
    %1012 = vmatpush2.msra.mxu0 0.0
    %1013 = vmatprep.subr.mxu0 0.0
    %1014 = vmatpush2.msra.mxu0 0.0
    %1015 = vmatprep.subr.mxu0 0.0
    %1016 = vmatpush2.msra.mxu0 0.0
    %1017 = vmatprep.subr.mxu0 0.0
    %1018 = vmatpush2.msra.mxu0 0.0
    %1019 = vmatprep.mubr.f32.mxu0 0.0
    %1020 = vmatmul.mubr.f32.gmra.mxu0 %v953
    %v1021 = vpop.f32.mrf.mxu0
    %v1022 = vadd.f32 0.0, %v1021
    %v1023 = vpop.f32.mrf.mxu0
    %v1024 = vadd.f32 0.0, %v1023
    %1025 = vdwg.mxu0
    %1026 = vmatprep.subr.mxu0 0.0
    %1027 = vmatpush1.msra.mxu0 0.0
    %1028 = vmatprep.subr.mxu0 0.0
    %1029 = vmatpush1.msra.mxu0 0.0
    %1030 = vmatprep.subr.mxu0 0.0
    %1031 = vmatpush1.msra.mxu0 0.0
    %1032 = vmatprep.subr.mxu0 0.0
    %1033 = vmatpush1.msra.mxu0 0.0
    %1034 = vmatprep.subr.mxu0 0.0
    %1035 = vmatpush1.msra.mxu0 0.0
    %1036 = vmatprep.subr.mxu0 0.0
    %1037 = vmatpush1.msra.mxu0 0.0
    %1038 = vmatprep.subr.mxu0 0.0
    %1039 = vmatpush1.msra.mxu0 0.0
    %1040 = vmatprep.subr.mxu0 0.0
    %1041 = vmatpush1.msra.mxu0 0.0
    %1042 = vmatprep.subr.mxu0 0.0
    %1043 = vmatpush1.msra.mxu0 0.0
    %1044 = vmatprep.subr.mxu0 0.0
    %1045 = vmatpush1.msra.mxu0 0.0
    %1046 = vmatprep.subr.mxu0 0.0
    %1047 = vmatpush1.msra.mxu0 0.0
    %1048 = vmatprep.subr.mxu0 0.0
    %1049 = vmatpush1.msra.mxu0 0.0
    %1050 = vmatprep.subr.mxu0 0.0
    %1051 = vmatpush1.msra.mxu0 %v241
    %1052 = vmatprep.subr.mxu0 0.0
    %1053 = vmatpush1.msra.mxu0 %v238
    %1054 = vmatprep.subr.mxu0 0.0
    %1055 = vmatpush1.msra.mxu0 %v235
    %1056 = vmatprep.subr.mxu0 0.0
    %1057 = vmatpush1.msra.mxu0 %v232
    %1058 = vmatprep.subr.mxu0 0.0
    %1059 = vmatpush2.msra.mxu0 0.0
    %1060 = vmatprep.subr.mxu0 0.0
    %1061 = vmatpush2.msra.mxu0 0.0
    %1062 = vmatprep.subr.mxu0 0.0
    %1063 = vmatpush2.msra.mxu0 0.0
    %1064 = vmatprep.subr.mxu0 0.0
    %1065 = vmatpush2.msra.mxu0 0.0
    %1066 = vmatprep.subr.mxu0 0.0
    %1067 = vmatpush2.msra.mxu0 0.0
    %1068 = vmatprep.subr.mxu0 0.0
    %1069 = vmatpush2.msra.mxu0 0.0
    %1070 = vmatprep.subr.mxu0 0.0
    %1071 = vmatpush2.msra.mxu0 0.0
    %1072 = vmatprep.subr.mxu0 0.0
    %1073 = vmatpush2.msra.mxu0 0.0
    %1074 = vmatprep.subr.mxu0 0.0
    %1075 = vmatpush2.msra.mxu0 0.0
    %1076 = vmatprep.subr.mxu0 0.0
    %1077 = vmatpush2.msra.mxu0 0.0
    %1078 = vmatprep.subr.mxu0 0.0
    %1079 = vmatpush2.msra.mxu0 0.0
    %1080 = vmatprep.subr.mxu0 0.0
    %1081 = vmatpush2.msra.mxu0 0.0
    %1082 = vmatprep.subr.mxu0 0.0
    %1083 = vmatpush2.msra.mxu0 0.0
    %1084 = vmatprep.subr.mxu0 0.0
    %1085 = vmatpush2.msra.mxu0 0.0
    %1086 = vmatprep.subr.mxu0 0.0
    %1087 = vmatpush2.msra.mxu0 0.0
    %1088 = vmatprep.subr.mxu0 0.0
    %1089 = vmatpush2.msra.mxu0 0.0
    %1090 = vmatprep.mubr.f32.mxu0 0.0
    %1091 = vmatmul.mubr.f32.gmra.mxu0 %v953
    %v1092 = vpop.f32.mrf.mxu0
    %v1093 = vadd.f32 0.0, %v1092
    %v1094 = vpop.f32.mrf.mxu0
    %1095 = vdwg.mxu0
    %v1097 = vrot.slane %v1022, 4
    %v1099 = vadd.f32 %v156, %v1097
    %v1100 = vxor.u32 %v1099, 2147483648
    %v1101 = vmul.f32 %v1100, 1.442695
    %v1102 = vpow.pop %v1101
    %v1103 = vadd.f32 %v1102, 1.0
    %v1104 = vrcp.pop %v1103
    %v1105 = vmul.f32 1.0, %v1104
    %v1107 = vrot.slane %v1024, 4
    %v1109 = vadd.f32 %v158, %v1107
    %v1110 = vxor.u32 %v1109, 2147483648
    %v1111 = vmul.f32 %v1110, 1.442695
    %v1112 = vpow.pop %v1111
    %v1113 = vadd.f32 %v1112, 1.0
    %v1114 = vrcp.pop %v1113
    %v1115 = vmul.f32 1.0, %v1114
    %v1116 = vadd.f32 %v1093, %v242
    %v1118 = vrot.slane %v1116, 4
    %v1120 = vmul.f32 %v1105, %v1118
    %v1121 = vadd.f32 %v227, %v1120
    %v1122 = vtanh.pop %v1121
    %v1124 = vrot.slane %v1122, 1
    %v1126 = vsub.f32 %v950, %v1124
    %v1128 = vrot.slane %v1126, 7
    %v1130 = vmul.f32 %v1115, %v1128
    %v1131 = vadd.f32 %v1122, %v1130
    %v1133 = vrot.slane %v1131, 4
    %v1134 = vsel %vm243, %v1133, 0
    %1136 = vmatprep.subr.mxu0 0.0
    %1137 = vmatpush1.msra.mxu0 0.0
    %1138 = vmatprep.subr.mxu0 0.0
    %1139 = vmatpush1.msra.mxu0 0.0
    %1140 = vmatprep.subr.mxu0 0.0
    %1141 = vmatpush1.msra.mxu0 0.0
    %1142 = vmatprep.subr.mxu0 0.0
    %1143 = vmatpush1.msra.mxu0 0.0
    %1144 = vmatprep.subr.mxu0 0.0
    %1145 = vmatpush1.msra.mxu0 0.0
    %1146 = vmatprep.subr.mxu0 0.0
    %1147 = vmatpush1.msra.mxu0 0.0
    %1148 = vmatprep.subr.mxu0 0.0
    %1149 = vmatpush1.msra.mxu0 0.0
    %1150 = vmatprep.subr.mxu0 0.0
    %1151 = vmatpush1.msra.mxu0 0.0
    %1152 = vmatprep.subr.mxu0 0.0
    %1153 = vmatpush1.msra.mxu0 0.0
    %1154 = vmatprep.subr.mxu0 0.0
    %1155 = vmatpush1.msra.mxu0 0.0
    %1156 = vmatprep.subr.mxu0 0.0
    %1157 = vmatpush1.msra.mxu0 0.0
    %1158 = vmatprep.subr.mxu0 0.0
    %1159 = vmatpush1.msra.mxu0 0.0
    %1160 = vmatprep.subr.mxu0 %v240
    %1161 = vmatpush1.msra.mxu0 %v239
    %1162 = vmatprep.subr.mxu0 %v237
    %1163 = vmatpush1.msra.mxu0 %v236
    %1164 = vmatprep.subr.mxu0 %v234
    %1165 = vmatpush1.msra.mxu0 %v233
    %1166 = vmatprep.subr.mxu0 %v231
    %1167 = vmatpush1.msra.mxu0 %v230
    %1168 = vmatprep.subr.mxu0 0.0
    %1169 = vmatpush2.msra.mxu0 0.0
    %1170 = vmatprep.subr.mxu0 0.0
    %1171 = vmatpush2.msra.mxu0 0.0
    %1172 = vmatprep.subr.mxu0 0.0
    %1173 = vmatpush2.msra.mxu0 0.0
    %1174 = vmatprep.subr.mxu0 0.0
    %1175 = vmatpush2.msra.mxu0 0.0
    %1176 = vmatprep.subr.mxu0 0.0
    %1177 = vmatpush2.msra.mxu0 0.0
    %1178 = vmatprep.subr.mxu0 0.0
    %1179 = vmatpush2.msra.mxu0 0.0
    %1180 = vmatprep.subr.mxu0 0.0
    %1181 = vmatpush2.msra.mxu0 0.0
    %1182 = vmatprep.subr.mxu0 0.0
    %1183 = vmatpush2.msra.mxu0 0.0
    %1184 = vmatprep.subr.mxu0 0.0
    %1185 = vmatpush2.msra.mxu0 0.0
    %1186 = vmatprep.subr.mxu0 0.0
    %1187 = vmatpush2.msra.mxu0 0.0
    %1188 = vmatprep.subr.mxu0 0.0
    %1189 = vmatpush2.msra.mxu0 0.0
    %1190 = vmatprep.subr.mxu0 0.0
    %1191 = vmatpush2.msra.mxu0 0.0
    %1192 = vmatprep.subr.mxu0 0.0
    %1193 = vmatpush2.msra.mxu0 0.0
    %1194 = vmatprep.subr.mxu0 0.0
    %1195 = vmatpush2.msra.mxu0 0.0
    %1196 = vmatprep.subr.mxu0 0.0
    %1197 = vmatpush2.msra.mxu0 0.0
    %1198 = vmatprep.subr.mxu0 0.0
    %1199 = vmatpush2.msra.mxu0 0.0
    %1200 = vmatprep.mubr.f32.mxu0 0.0
    %1201 = vmatmul.mubr.f32.gmra.mxu0 %v1134
    %v1202 = vpop.f32.mrf.mxu0
    %v1203 = vadd.f32 0.0, %v1202
    %v1204 = vpop.f32.mrf.mxu0
    %v1205 = vadd.f32 0.0, %v1204
    %1206 = vdwg.mxu0
    %1207 = vmatprep.subr.mxu0 0.0
    %1208 = vmatpush1.msra.mxu0 0.0
    %1209 = vmatprep.subr.mxu0 0.0
    %1210 = vmatpush1.msra.mxu0 0.0
    %1211 = vmatprep.subr.mxu0 0.0
    %1212 = vmatpush1.msra.mxu0 0.0
    %1213 = vmatprep.subr.mxu0 0.0
    %1214 = vmatpush1.msra.mxu0 0.0
    %1215 = vmatprep.subr.mxu0 0.0
    %1216 = vmatpush1.msra.mxu0 0.0
    %1217 = vmatprep.subr.mxu0 0.0
    %1218 = vmatpush1.msra.mxu0 0.0
    %1219 = vmatprep.subr.mxu0 0.0
    %1220 = vmatpush1.msra.mxu0 0.0
    %1221 = vmatprep.subr.mxu0 0.0
    %1222 = vmatpush1.msra.mxu0 0.0
    %1223 = vmatprep.subr.mxu0 0.0
    %1224 = vmatpush1.msra.mxu0 0.0
    %1225 = vmatprep.subr.mxu0 0.0
    %1226 = vmatpush1.msra.mxu0 0.0
    %1227 = vmatprep.subr.mxu0 0.0
    %1228 = vmatpush1.msra.mxu0 0.0
    %1229 = vmatprep.subr.mxu0 0.0
    %1230 = vmatpush1.msra.mxu0 0.0
    %1231 = vmatprep.subr.mxu0 0.0
    %1232 = vmatpush1.msra.mxu0 %v241
    %1233 = vmatprep.subr.mxu0 0.0
    %1234 = vmatpush1.msra.mxu0 %v238
    %1235 = vmatprep.subr.mxu0 0.0
    %1236 = vmatpush1.msra.mxu0 %v235
    %1237 = vmatprep.subr.mxu0 0.0
    %1238 = vmatpush1.msra.mxu0 %v232
    %1239 = vmatprep.subr.mxu0 0.0
    %1240 = vmatpush2.msra.mxu0 0.0
    %1241 = vmatprep.subr.mxu0 0.0
    %1242 = vmatpush2.msra.mxu0 0.0
    %1243 = vmatprep.subr.mxu0 0.0
    %1244 = vmatpush2.msra.mxu0 0.0
    %1245 = vmatprep.subr.mxu0 0.0
    %1246 = vmatpush2.msra.mxu0 0.0
    %1247 = vmatprep.subr.mxu0 0.0
    %1248 = vmatpush2.msra.mxu0 0.0
    %1249 = vmatprep.subr.mxu0 0.0
    %1250 = vmatpush2.msra.mxu0 0.0
    %1251 = vmatprep.subr.mxu0 0.0
    %1252 = vmatpush2.msra.mxu0 0.0
    %1253 = vmatprep.subr.mxu0 0.0
    %1254 = vmatpush2.msra.mxu0 0.0
    %1255 = vmatprep.subr.mxu0 0.0
    %1256 = vmatpush2.msra.mxu0 0.0
    %1257 = vmatprep.subr.mxu0 0.0
    %1258 = vmatpush2.msra.mxu0 0.0
    %1259 = vmatprep.subr.mxu0 0.0
    %1260 = vmatpush2.msra.mxu0 0.0
    %1261 = vmatprep.subr.mxu0 0.0
    %1262 = vmatpush2.msra.mxu0 0.0
    %1263 = vmatprep.subr.mxu0 0.0
    %1264 = vmatpush2.msra.mxu0 0.0
    %1265 = vmatprep.subr.mxu0 0.0
    %1266 = vmatpush2.msra.mxu0 0.0
    %1267 = vmatprep.subr.mxu0 0.0
    %1268 = vmatpush2.msra.mxu0 0.0
    %1269 = vmatprep.subr.mxu0 0.0
    %1270 = vmatpush2.msra.mxu0 0.0
    %1271 = vmatprep.mubr.f32.mxu0 0.0
    %1272 = vmatmul.mubr.f32.gmra.mxu0 %v1134
    %v1273 = vpop.f32.mrf.mxu0
    %v1274 = vadd.f32 0.0, %v1273
    %v1275 = vpop.f32.mrf.mxu0
    %1276 = vdwg.mxu0
    %v1278 = vrot.slane %v1203, 3
    %v1280 = vadd.f32 %v156, %v1278
    %v1281 = vxor.u32 %v1280, 2147483648
    %v1282 = vmul.f32 %v1281, 1.442695
    %v1283 = vpow.pop %v1282
    %v1284 = vadd.f32 %v1283, 1.0
    %v1285 = vrcp.pop %v1284
    %v1286 = vmul.f32 1.0, %v1285
    %v1288 = vrot.slane %v1205, 3
    %v1290 = vadd.f32 %v158, %v1288
    %v1291 = vxor.u32 %v1290, 2147483648
    %v1292 = vmul.f32 %v1291, 1.442695
    %v1293 = vpow.pop %v1292
    %v1294 = vadd.f32 %v1293, 1.0
    %v1295 = vrcp.pop %v1294
    %v1296 = vmul.f32 1.0, %v1295
    %v1297 = vadd.f32 %v1274, %v242
    %v1299 = vrot.slane %v1297, 3
    %v1301 = vmul.f32 %v1286, %v1299
    %v1302 = vadd.f32 %v227, %v1301
    %v1303 = vtanh.pop %v1302
    %v1305 = vrot.slane %v1303, 1
    %v1307 = vsub.f32 %v1131, %v1305
    %v1309 = vrot.slane %v1307, 7
    %v1311 = vmul.f32 %v1296, %v1309
    %v1312 = vadd.f32 %v1303, %v1311
    %v1314 = vrot.slane %v1312, 5
    %v1315 = vsel %vm243, %v1314, 0
    %1317 = vmatprep.subr.mxu0 0.0
    %1318 = vmatpush1.msra.mxu0 0.0
    %1319 = vmatprep.subr.mxu0 0.0
    %1320 = vmatpush1.msra.mxu0 0.0
    %1321 = vmatprep.subr.mxu0 0.0
    %1322 = vmatpush1.msra.mxu0 0.0
    %1323 = vmatprep.subr.mxu0 0.0
    %1324 = vmatpush1.msra.mxu0 0.0
    %1325 = vmatprep.subr.mxu0 0.0
    %1326 = vmatpush1.msra.mxu0 0.0
    %1327 = vmatprep.subr.mxu0 0.0
    %1328 = vmatpush1.msra.mxu0 0.0
    %1329 = vmatprep.subr.mxu0 0.0
    %1330 = vmatpush1.msra.mxu0 0.0
    %1331 = vmatprep.subr.mxu0 0.0
    %1332 = vmatpush1.msra.mxu0 0.0
    %1333 = vmatprep.subr.mxu0 0.0
    %1334 = vmatpush1.msra.mxu0 0.0
    %1335 = vmatprep.subr.mxu0 0.0
    %1336 = vmatpush1.msra.mxu0 0.0
    %1337 = vmatprep.subr.mxu0 0.0
    %1338 = vmatpush1.msra.mxu0 0.0
    %1339 = vmatprep.subr.mxu0 0.0
    %1340 = vmatpush1.msra.mxu0 0.0
    %1341 = vmatprep.subr.mxu0 %v240
    %1342 = vmatpush1.msra.mxu0 %v239
    %1343 = vmatprep.subr.mxu0 %v237
    %1344 = vmatpush1.msra.mxu0 %v236
    %1345 = vmatprep.subr.mxu0 %v234
    %1346 = vmatpush1.msra.mxu0 %v233
    %1347 = vmatprep.subr.mxu0 %v231
    %1348 = vmatpush1.msra.mxu0 %v230
    %1349 = vmatprep.subr.mxu0 0.0
    %1350 = vmatpush2.msra.mxu0 0.0
    %1351 = vmatprep.subr.mxu0 0.0
    %1352 = vmatpush2.msra.mxu0 0.0
    %1353 = vmatprep.subr.mxu0 0.0
    %1354 = vmatpush2.msra.mxu0 0.0
    %1355 = vmatprep.subr.mxu0 0.0
    %1356 = vmatpush2.msra.mxu0 0.0
    %1357 = vmatprep.subr.mxu0 0.0
    %1358 = vmatpush2.msra.mxu0 0.0
    %1359 = vmatprep.subr.mxu0 0.0
    %1360 = vmatpush2.msra.mxu0 0.0
    %1361 = vmatprep.subr.mxu0 0.0
    %1362 = vmatpush2.msra.mxu0 0.0
    %1363 = vmatprep.subr.mxu0 0.0
    %1364 = vmatpush2.msra.mxu0 0.0
    %1365 = vmatprep.subr.mxu0 0.0
    %1366 = vmatpush2.msra.mxu0 0.0
    %1367 = vmatprep.subr.mxu0 0.0
    %1368 = vmatpush2.msra.mxu0 0.0
    %1369 = vmatprep.subr.mxu0 0.0
    %1370 = vmatpush2.msra.mxu0 0.0
    %1371 = vmatprep.subr.mxu0 0.0
    %1372 = vmatpush2.msra.mxu0 0.0
    %1373 = vmatprep.subr.mxu0 0.0
    %1374 = vmatpush2.msra.mxu0 0.0
    %1375 = vmatprep.subr.mxu0 0.0
    %1376 = vmatpush2.msra.mxu0 0.0
    %1377 = vmatprep.subr.mxu0 0.0
    %1378 = vmatpush2.msra.mxu0 0.0
    %1379 = vmatprep.subr.mxu0 0.0
    %1380 = vmatpush2.msra.mxu0 0.0
    %1381 = vmatprep.mubr.f32.mxu0 0.0
    %1382 = vmatmul.mubr.f32.gmra.mxu0 %v1315
    %v1383 = vpop.f32.mrf.mxu0
    %v1384 = vadd.f32 0.0, %v1383
    %v1385 = vpop.f32.mrf.mxu0
    %v1386 = vadd.f32 0.0, %v1385
    %1387 = vdwg.mxu0
    %1388 = vmatprep.subr.mxu0 0.0
    %1389 = vmatpush1.msra.mxu0 0.0
    %1390 = vmatprep.subr.mxu0 0.0
    %1391 = vmatpush1.msra.mxu0 0.0
    %1392 = vmatprep.subr.mxu0 0.0
    %1393 = vmatpush1.msra.mxu0 0.0
    %1394 = vmatprep.subr.mxu0 0.0
    %1395 = vmatpush1.msra.mxu0 0.0
    %1396 = vmatprep.subr.mxu0 0.0
    %1397 = vmatpush1.msra.mxu0 0.0
    %1398 = vmatprep.subr.mxu0 0.0
    %1399 = vmatpush1.msra.mxu0 0.0
    %1400 = vmatprep.subr.mxu0 0.0
    %1401 = vmatpush1.msra.mxu0 0.0
    %1402 = vmatprep.subr.mxu0 0.0
    %1403 = vmatpush1.msra.mxu0 0.0
    %1404 = vmatprep.subr.mxu0 0.0
    %1405 = vmatpush1.msra.mxu0 0.0
    %1406 = vmatprep.subr.mxu0 0.0
    %1407 = vmatpush1.msra.mxu0 0.0
    %1408 = vmatprep.subr.mxu0 0.0
    %1409 = vmatpush1.msra.mxu0 0.0
    %1410 = vmatprep.subr.mxu0 0.0
    %1411 = vmatpush1.msra.mxu0 0.0
    %1412 = vmatprep.subr.mxu0 0.0
    %1413 = vmatpush1.msra.mxu0 %v241
    %1414 = vmatprep.subr.mxu0 0.0
    %1415 = vmatpush1.msra.mxu0 %v238
    %1416 = vmatprep.subr.mxu0 0.0
    %1417 = vmatpush1.msra.mxu0 %v235
    %1418 = vmatprep.subr.mxu0 0.0
    %1419 = vmatpush1.msra.mxu0 %v232
    %1420 = vmatprep.subr.mxu0 0.0
    %1421 = vmatpush2.msra.mxu0 0.0
    %1422 = vmatprep.subr.mxu0 0.0
    %1423 = vmatpush2.msra.mxu0 0.0
    %1424 = vmatprep.subr.mxu0 0.0
    %1425 = vmatpush2.msra.mxu0 0.0
    %1426 = vmatprep.subr.mxu0 0.0
    %1427 = vmatpush2.msra.mxu0 0.0
    %1428 = vmatprep.subr.mxu0 0.0
    %1429 = vmatpush2.msra.mxu0 0.0
    %1430 = vmatprep.subr.mxu0 0.0
    %1431 = vmatpush2.msra.mxu0 0.0
    %1432 = vmatprep.subr.mxu0 0.0
    %1433 = vmatpush2.msra.mxu0 0.0
    %1434 = vmatprep.subr.mxu0 0.0
    %1435 = vmatpush2.msra.mxu0 0.0
    %1436 = vmatprep.subr.mxu0 0.0
    %1437 = vmatpush2.msra.mxu0 0.0
    %1438 = vmatprep.subr.mxu0 0.0
    %1439 = vmatpush2.msra.mxu0 0.0
    %1440 = vmatprep.subr.mxu0 0.0
    %1441 = vmatpush2.msra.mxu0 0.0
    %1442 = vmatprep.subr.mxu0 0.0
    %1443 = vmatpush2.msra.mxu0 0.0
    %1444 = vmatprep.subr.mxu0 0.0
    %1445 = vmatpush2.msra.mxu0 0.0
    %1446 = vmatprep.subr.mxu0 0.0
    %1447 = vmatpush2.msra.mxu0 0.0
    %1448 = vmatprep.subr.mxu0 0.0
    %1449 = vmatpush2.msra.mxu0 0.0
    %1450 = vmatprep.subr.mxu0 0.0
    %1451 = vmatpush2.msra.mxu0 0.0
    %1452 = vmatprep.mubr.f32.mxu0 0.0
    %1453 = vmatmul.mubr.f32.gmra.mxu0 %v1315
    %v1454 = vpop.f32.mrf.mxu0
    %v1455 = vadd.f32 0.0, %v1454
    %v1456 = vpop.f32.mrf.mxu0
    %1457 = vdwg.mxu0
    %v1459 = vrot.slane %v1384, 2
    %v1461 = vadd.f32 %v156, %v1459
    %v1462 = vxor.u32 %v1461, 2147483648
    %v1463 = vmul.f32 %v1462, 1.442695
    %v1464 = vpow.pop %v1463
    %v1465 = vadd.f32 %v1464, 1.0
    %v1466 = vrcp.pop %v1465
    %v1467 = vmul.f32 1.0, %v1466
    %v1469 = vrot.slane %v1386, 2
    %v1471 = vadd.f32 %v158, %v1469
    %v1472 = vxor.u32 %v1471, 2147483648
    %v1473 = vmul.f32 %v1472, 1.442695
    %v1474 = vpow.pop %v1473
    %v1475 = vadd.f32 %v1474, 1.0
    %v1476 = vrcp.pop %v1475
    %v1477 = vmul.f32 1.0, %v1476
    %v1478 = vadd.f32 %v1455, %v242
    %v1480 = vrot.slane %v1478, 2
    %v1482 = vmul.f32 %v1467, %v1480
    %v1483 = vadd.f32 %v227, %v1482
    %v1484 = vtanh.pop %v1483
    %v1486 = vrot.slane %v1484, 1
    %v1488 = vsub.f32 %v1312, %v1486
    %v1490 = vrot.slane %v1488, 7
    %v1492 = vmul.f32 %v1477, %v1490
    %v1493 = vadd.f32 %v1484, %v1492
    %v1495 = vrot.slane %v1493, 6
    %v1496 = vsel %vm243, %v1495, 0
    %1498 = vmatprep.subr.mxu0 0.0
    %1499 = vmatpush1.msra.mxu0 0.0
    %1500 = vmatprep.subr.mxu0 0.0
    %1501 = vmatpush1.msra.mxu0 0.0
    %1502 = vmatprep.subr.mxu0 0.0
    %1503 = vmatpush1.msra.mxu0 0.0
    %1504 = vmatprep.subr.mxu0 0.0
    %1505 = vmatpush1.msra.mxu0 0.0
    %1506 = vmatprep.subr.mxu0 0.0
    %1507 = vmatpush1.msra.mxu0 0.0
    %1508 = vmatprep.subr.mxu0 0.0
    %1509 = vmatpush1.msra.mxu0 0.0
    %1510 = vmatprep.subr.mxu0 0.0
    %1511 = vmatpush1.msra.mxu0 0.0
    %1512 = vmatprep.subr.mxu0 0.0
    %1513 = vmatpush1.msra.mxu0 0.0
    %1514 = vmatprep.subr.mxu0 0.0
    %1515 = vmatpush1.msra.mxu0 0.0
    %1516 = vmatprep.subr.mxu0 0.0
    %1517 = vmatpush1.msra.mxu0 0.0
    %1518 = vmatprep.subr.mxu0 0.0
    %1519 = vmatpush1.msra.mxu0 0.0
    %1520 = vmatprep.subr.mxu0 0.0
    %1521 = vmatpush1.msra.mxu0 0.0
    %1522 = vmatprep.subr.mxu0 %v240
    %1523 = vmatpush1.msra.mxu0 %v239
    %1524 = vmatprep.subr.mxu0 %v237
    %1525 = vmatpush1.msra.mxu0 %v236
    %1526 = vmatprep.subr.mxu0 %v234
    %1527 = vmatpush1.msra.mxu0 %v233
    %1528 = vmatprep.subr.mxu0 %v231
    %1529 = vmatpush1.msra.mxu0 %v230
    %1530 = vmatprep.subr.mxu0 0.0
    %1531 = vmatpush2.msra.mxu0 0.0
    %1532 = vmatprep.subr.mxu0 0.0
    %1533 = vmatpush2.msra.mxu0 0.0
    %1534 = vmatprep.subr.mxu0 0.0
    %1535 = vmatpush2.msra.mxu0 0.0
    %1536 = vmatprep.subr.mxu0 0.0
    %1537 = vmatpush2.msra.mxu0 0.0
    %1538 = vmatprep.subr.mxu0 0.0
    %1539 = vmatpush2.msra.mxu0 0.0
    %1540 = vmatprep.subr.mxu0 0.0
    %1541 = vmatpush2.msra.mxu0 0.0
    %1542 = vmatprep.subr.mxu0 0.0
    %1543 = vmatpush2.msra.mxu0 0.0
    %1544 = vmatprep.subr.mxu0 0.0
    %1545 = vmatpush2.msra.mxu0 0.0
    %1546 = vmatprep.subr.mxu0 0.0
    %1547 = vmatpush2.msra.mxu0 0.0
    %1548 = vmatprep.subr.mxu0 0.0
    %1549 = vmatpush2.msra.mxu0 0.0
    %1550 = vmatprep.subr.mxu0 0.0
    %1551 = vmatpush2.msra.mxu0 0.0
    %1552 = vmatprep.subr.mxu0 0.0
    %1553 = vmatpush2.msra.mxu0 0.0
    %1554 = vmatprep.subr.mxu0 0.0
    %1555 = vmatpush2.msra.mxu0 0.0
    %1556 = vmatprep.subr.mxu0 0.0
    %1557 = vmatpush2.msra.mxu0 0.0
    %1558 = vmatprep.subr.mxu0 0.0
    %1559 = vmatpush2.msra.mxu0 0.0
    %1560 = vmatprep.subr.mxu0 0.0
    %1561 = vmatpush2.msra.mxu0 0.0
    %1562 = vmatprep.mubr.f32.mxu0 0.0
    %1563 = vmatmul.mubr.f32.gmra.mxu0 %v1496
    %v1564 = vpop.f32.mrf.mxu0
    %v1565 = vadd.f32 0.0, %v1564
    %v1566 = vpop.f32.mrf.mxu0
    %v1567 = vadd.f32 0.0, %v1566
    %1568 = vdwg.mxu0
    %1569 = vmatprep.subr.mxu0 0.0
    %1570 = vmatpush1.msra.mxu0 0.0
    %1571 = vmatprep.subr.mxu0 0.0
    %1572 = vmatpush1.msra.mxu0 0.0
    %1573 = vmatprep.subr.mxu0 0.0
    %1574 = vmatpush1.msra.mxu0 0.0
    %1575 = vmatprep.subr.mxu0 0.0
    %1576 = vmatpush1.msra.mxu0 0.0
    %1577 = vmatprep.subr.mxu0 0.0
    %1578 = vmatpush1.msra.mxu0 0.0
    %1579 = vmatprep.subr.mxu0 0.0
    %1580 = vmatpush1.msra.mxu0 0.0
    %1581 = vmatprep.subr.mxu0 0.0
    %1582 = vmatpush1.msra.mxu0 0.0
    %1583 = vmatprep.subr.mxu0 0.0
    %1584 = vmatpush1.msra.mxu0 0.0
    %1585 = vmatprep.subr.mxu0 0.0
    %1586 = vmatpush1.msra.mxu0 0.0
    %1587 = vmatprep.subr.mxu0 0.0
    %1588 = vmatpush1.msra.mxu0 0.0
    %1589 = vmatprep.subr.mxu0 0.0
    %1590 = vmatpush1.msra.mxu0 0.0
    %1591 = vmatprep.subr.mxu0 0.0
    %1592 = vmatpush1.msra.mxu0 0.0
    %1593 = vmatprep.subr.mxu0 0.0
    %1594 = vmatpush1.msra.mxu0 %v241
    %1595 = vmatprep.subr.mxu0 0.0
    %1596 = vmatpush1.msra.mxu0 %v238
    %1597 = vmatprep.subr.mxu0 0.0
    %1598 = vmatpush1.msra.mxu0 %v235
    %1599 = vmatprep.subr.mxu0 0.0
    %1600 = vmatpush1.msra.mxu0 %v232
    %1601 = vmatprep.subr.mxu0 0.0
    %1602 = vmatpush2.msra.mxu0 0.0
    %1603 = vmatprep.subr.mxu0 0.0
    %1604 = vmatpush2.msra.mxu0 0.0
    %1605 = vmatprep.subr.mxu0 0.0
    %1606 = vmatpush2.msra.mxu0 0.0
    %1607 = vmatprep.subr.mxu0 0.0
    %1608 = vmatpush2.msra.mxu0 0.0
    %1609 = vmatprep.subr.mxu0 0.0
    %1610 = vmatpush2.msra.mxu0 0.0
    %1611 = vmatprep.subr.mxu0 0.0
    %1612 = vmatpush2.msra.mxu0 0.0
    %1613 = vmatprep.subr.mxu0 0.0
    %1614 = vmatpush2.msra.mxu0 0.0
    %1615 = vmatprep.subr.mxu0 0.0
    %1616 = vmatpush2.msra.mxu0 0.0
    %1617 = vmatprep.subr.mxu0 0.0
    %1618 = vmatpush2.msra.mxu0 0.0
    %1619 = vmatprep.subr.mxu0 0.0
    %1620 = vmatpush2.msra.mxu0 0.0
    %1621 = vmatprep.subr.mxu0 0.0
    %1622 = vmatpush2.msra.mxu0 0.0
    %1623 = vmatprep.subr.mxu0 0.0
    %1624 = vmatpush2.msra.mxu0 0.0
    %1625 = vmatprep.subr.mxu0 0.0
    %1626 = vmatpush2.msra.mxu0 0.0
    %1627 = vmatprep.subr.mxu0 0.0
    %1628 = vmatpush2.msra.mxu0 0.0
    %1629 = vmatprep.subr.mxu0 0.0
    %1630 = vmatpush2.msra.mxu0 0.0
    %1631 = vmatprep.subr.mxu0 0.0
    %1632 = vmatpush2.msra.mxu0 0.0
    %1633 = vmatprep.mubr.f32.mxu0 0.0
    %1634 = vmatmul.mubr.f32.gmra.mxu0 %v1496
    %v1635 = vpop.f32.mrf.mxu0
    %v1636 = vadd.f32 0.0, %v1635
    %v1637 = vpop.f32.mrf.mxu0
    %1638 = vdwg.mxu0
    %v1640 = vrot.slane %v1565, 1
    %v1642 = vadd.f32 %v156, %v1640
    %v1643 = vxor.u32 %v1642, 2147483648
    %v1644 = vmul.f32 %v1643, 1.442695
    %v1645 = vpow.pop %v1644
    %v1646 = vadd.f32 %v1645, 1.0
    %v1647 = vrcp.pop %v1646
    %v1648 = vmul.f32 1.0, %v1647
    %v1650 = vrot.slane %v1567, 1
    %v1652 = vadd.f32 %v158, %v1650
    %v1653 = vxor.u32 %v1652, 2147483648
    %v1654 = vmul.f32 %v1653, 1.442695
    %v1655 = vpow.pop %v1654
    %v1656 = vadd.f32 %v1655, 1.0
    %v1657 = vrcp.pop %v1656
    %v1658 = vmul.f32 1.0, %v1657
    %v1659 = vadd.f32 %v1636, %v242
    %v1661 = vrot.slane %v1659, 1
    %v1663 = vmul.f32 %v1648, %v1661
    %v1664 = vadd.f32 %v227, %v1663
    %v1665 = vtanh.pop %v1664
    %v1667 = vrot.slane %v1665, 1
    %v1669 = vsub.f32 %v1493, %v1667
    %v1671 = vrot.slane %v1669, 7
    %v1673 = vmul.f32 %v1658, %v1671
    %v1674 = vadd.f32 %v1665, %v1673
    %v1675 = vld [vmem:[#allocation6] sm:$0xff]
    %v1676 = vld [vmem:[#allocation6 + $0x8] sm:$0xff]
    %v1677 = vld [vmem:[#allocation6 + $0x10] sm:$0xff]
    %v1678 = vld [vmem:[#allocation6 + $0x18] sm:$0xff]
    %v1679 = vld [vmem:[%s6] sm:$0x1]
    %v1681 = vrot.slane %v1674, 7
    %v1682 = vsel %vm243, %v1681, 0
    %1684 = vmatprep.subr.mxu0 0.0
    %1685 = vmatpush1.msra.mxu0 0.0
    %1686 = vmatprep.subr.mxu0 0.0
    %1687 = vmatpush1.msra.mxu0 0.0
    %1688 = vmatprep.subr.mxu0 0.0
    %1689 = vmatpush1.msra.mxu0 0.0
    %1690 = vmatprep.subr.mxu0 0.0
    %1691 = vmatpush1.msra.mxu0 0.0
    %1692 = vmatprep.subr.mxu0 0.0
    %1693 = vmatpush1.msra.mxu0 0.0
    %1694 = vmatprep.subr.mxu0 0.0
    %1695 = vmatpush1.msra.mxu0 0.0
    %1696 = vmatprep.subr.mxu0 0.0
    %1697 = vmatpush1.msra.mxu0 0.0
    %1698 = vmatprep.subr.mxu0 0.0
    %1699 = vmatpush1.msra.mxu0 0.0
    %1700 = vmatprep.subr.mxu0 0.0
    %1701 = vmatpush1.msra.mxu0 0.0
    %1702 = vmatprep.subr.mxu0 0.0
    %1703 = vmatpush1.msra.mxu0 0.0
    %1704 = vmatprep.subr.mxu0 0.0
    %1705 = vmatpush1.msra.mxu0 0.0
    %1706 = vmatprep.subr.mxu0 0.0
    %1707 = vmatpush1.msra.mxu0 0.0
    %1708 = vmatprep.subr.mxu0 0.0
    %1709 = vmatpush1.msra.mxu0 %v1678
    %1710 = vmatprep.subr.mxu0 0.0
    %1711 = vmatpush1.msra.mxu0 %v1677
    %1712 = vmatprep.subr.mxu0 0.0
    %1713 = vmatpush1.msra.mxu0 %v1676
    %1714 = vmatprep.subr.mxu0 0.0
    %1715 = vmatpush1.msra.mxu0 %v1675
    %1716 = vmatprep.subr.mxu0 0.0
    %1717 = vmatpush2.msra.mxu0 0.0
    %1718 = vmatprep.subr.mxu0 0.0
    %1719 = vmatpush2.msra.mxu0 0.0
    %1720 = vmatprep.subr.mxu0 0.0
    %1721 = vmatpush2.msra.mxu0 0.0
    %1722 = vmatprep.subr.mxu0 0.0
    %1723 = vmatpush2.msra.mxu0 0.0
    %1724 = vmatprep.subr.mxu0 0.0
    %1725 = vmatpush2.msra.mxu0 0.0
    %1726 = vmatprep.subr.mxu0 0.0
    %1727 = vmatpush2.msra.mxu0 0.0
    %1728 = vmatprep.subr.mxu0 0.0
    %1729 = vmatpush2.msra.mxu0 0.0
    %1730 = vmatprep.subr.mxu0 0.0
    %1731 = vmatpush2.msra.mxu0 0.0
    %1732 = vmatprep.subr.mxu0 0.0
    %1733 = vmatpush2.msra.mxu0 0.0
    %1734 = vmatprep.subr.mxu0 0.0
    %1735 = vmatpush2.msra.mxu0 0.0
    %1736 = vmatprep.subr.mxu0 0.0
    %1737 = vmatpush2.msra.mxu0 0.0
    %1738 = vmatprep.subr.mxu0 0.0
    %1739 = vmatpush2.msra.mxu0 0.0
    %1740 = vmatprep.subr.mxu0 0.0
    %1741 = vmatpush2.msra.mxu0 0.0
    %1742 = vmatprep.subr.mxu0 0.0
    %1743 = vmatpush2.msra.mxu0 0.0
    %1744 = vmatprep.subr.mxu0 0.0
    %1745 = vmatpush2.msra.mxu0 0.0
    %1746 = vmatprep.subr.mxu0 0.0
    %1747 = vmatpush2.msra.mxu0 0.0
    %1748 = vmatprep.mubr.f32.mxu0 0.0
    %1749 = vmatmul.mubr.f32.gmra.mxu0 %v1682
    %v1750 = vpop.f32.mrf.mxu0
    %v1751 = vadd.f32 %v1679, %v1750
    %v1752 = vpop.f32.mrf.mxu0
    %1753 = vdwg.mxu0
    %v1754 = vxor.u32 %v1751, 2147483648
    %v1755 = vmul.f32 %v1754, 1.442695
    %v1756 = vpow.pop %v1755
    %v1757 = vadd.f32 %v1756, 1.0
    %v1758 = vrcp.pop %v1757
    %v1759 = vmul.f32 1.0, %v1758
    %1760 = vst [vmem:[#allocation8] sm:$0x1] %v1759
    // Predicated region
    $region38: #{tpu_custom_call.1} parent=1 // pred_check
      _
    $region39: #{tpu_custom_call.1} parent=1 // pred_check_branch
      %1762 = sbr.rel (0) target = $region41
    $region40: #{tpu_custom_call.1} parent=1 // pred_region
      %s1764 = ssub.s32 16, 16
      %1765 = vsyncadd [#allocation5], %s1764
      %s1767 = sshll.u32 [#allocation8], 4
      %s1768 = int_to_ptr.vmem [resolvable:$true] %s1767
      %1770 = dma.vmem_to_hbm [thread:$0]  %s1768, 16, %s7, [#allocation5]
    $region41: #{tpu_custom_call.1} parent=1 // pred_fallthru
      _
    // Predicated region
    $region42: #{tpu_custom_call.1} parent=1 // pred_check
      _
    $region43: #{tpu_custom_call.1} parent=1 // pred_check_branch
      %1772 = sbr.rel (0) target = $region45
    $region44: #{tpu_custom_call.1} parent=1 // pred_region
      %1773 = dma.done [#allocation5], 16
    $region45: #{tpu_custom_call.1} parent=1 // pred_fallthru
      _
    %1774 = vsyncpa [#allocation4], 1
    %1775 = vsyncpa [#allocation7], 1
    %1776 = vsyncpa [#allocation5], 1

</llo_original>
